<compile_context>
chip_gen: v7x
topology: tpu7x:2x2x1
jax: 0.10.0
libtpu: 0.0.40
codegen_flags: <defaults>
</compile_context>

<pallas_src>
import jax
import jax.numpy as jnp
from jax.experimental import pallas as pl
from jax.experimental.pallas import tpu as pltpu

# ----- "FLAGS" (fixed deterministically in-script) -----
EMBEDDING_DIM = 32
BOTTLENECK_SIZE = 8
ARCH_MUL = 4
BN_EPS = 1e-5
STATE_DIM = 24            # fixed by the module's Linear(24, ...) / final Linear(..., 24)
LANES = 128               # every feature axis is zero-padded to one full lane tile

# f32 keeps exact fidelity to the PyTorch f32 forward at these tiny shapes.
# Once N is scaled up on v6e/v7x, flip to jnp.bfloat16 for the matmul operands
# (accumulation stays f32 via preferred_element_type; BN stats stay f32).
MXU_DTYPE = jnp.float32

_N_ENC = 5                # encoder Linear+ReLU+BN blocks
_N_DEC = 4                # decoder Linear+ReLU+BN blocks (before the final Linear)


def _build_vec_layout():
    """Row offsets inside the packed (rows, 128) bias/gamma/beta slab."""
    off = {"ab": 0}                       # rows [0, K): act1 @ W1[:E] + b1 (param-only)
    r = BOTTLENECK_SIZE
    for i in range(_N_ENC):
        off[f"enc{i}"] = r                # b, gamma, beta
        r += 3
    off["dec0"] = r                       # gamma, beta (its bias is folded into "ab")
    r += 2
    for i in range(1, _N_DEC):
        off[f"dec{i}"] = r                # b, gamma, beta
        r += 3
    off["bf"] = r                         # final Linear bias
    r += 1
    off["rows"] = ((r + 7) // 8) * 8      # pad row count to a sublane multiple
    return off


_VEC = _build_vec_layout()


def _dot(a, b):
    return jnp.dot(a.astype(MXU_DTYPE), b.astype(MXU_DTYPE),
                   preferred_element_type=jnp.float32)


def _bn_train(y, gamma, beta):
    # Training-mode BatchNorm1d over all rows: batch mean / biased variance.
    # gamma is folded into the rsqrt scale (a (1,128) row op); rsqrt runs on the EUP.
    # TODO(synk): PyTorch's running_mean/var buffer updates (training-time side
    # effect) are not reproduced; they do not affect the returned forward values.
    mean = jnp.mean(y, axis=0, keepdims=True)
    d = y - mean
    var = jnp.mean(d * d, axis=0, keepdims=True)
    scale = jax.lax.rsqrt(var + BN_EPS) * gamma
    return d * scale + beta


def _tile_rows(block, n):
    """Replicate a (K, C) row-block n times along rows -> (n*K, C)."""
    if n == 1:
        return block
    if n <= 32:
        # Unrolled sublane concat: bulletproof lowering at small n (demo path).
        return jnp.concatenate([block] * n, axis=0)
    k, c = block.shape
    # Large n: leading-dim broadcast + layout-preserving collapse (K == sublane tile).
    return jnp.broadcast_to(block[None, :, :], (n, k, c)).reshape(n * k, c)


# ----------------- Fused Pallas kernel -----------------
def _make_forward_kernel(n_tiles):
    """Fused encoder -> split decoder-layer-1 -> decoder -> final Linear.

    n_tiles = N (batch size); the kernel operates on N*K rows (row r = n*K + k),
    all resident in VMEM, single grid-less invocation, 3 input DMAs.
    """
    K = BOTTLENECK_SIZE

    def kernel(x_ref, w_ref, v_ref, o_ref):
        h = x_ref[...]                                    # (N*K, 128), lanes>=24 are 0
        wi = 0

        # ----- encoder: Linear -> ReLU -> BatchNorm1d (full-batch training stats;
        #       replicated rows give exactly the original per-state statistics) -----
        for i in range(_N_ENC):
            o = _VEC[f"enc{i}"]
            b, g, be = v_ref[o], v_ref[o + 1], v_ref[o + 2]
            y = jnp.maximum(_dot(h, w_ref[wi]) + b, 0.0)  # MXU + VPU
            wi += 1
            h = _bn_train(y, g, be)                       # XLU reduce + EUP + VPU

        # ----- decoder layer 1, algebraically split (no (N*K, 2E) concat):
        #       psi @ W1 = tile(act1 @ W1[:E] + b1) + phi_rep @ W1[E:] -----
        ab = v_ref[pl.ds(0, K), :]                        # (K, 128) precomputed block
        ab_rep = _tile_rows(ab, n_tiles)                  # (N*K, 128), no MXU pass
        y = jnp.maximum(_dot(h, w_ref[wi]) + ab_rep, 0.0)
        wi += 1
        o = _VEC["dec0"]
        h = _bn_train(y, v_ref[o], v_ref[o + 1])

        # ----- remaining decoder layers -----
        for i in range(1, _N_DEC):
            o = _VEC[f"dec{i}"]
            b, g, be = v_ref[o], v_ref[o + 1], v_ref[o + 2]
            y = jnp.maximum(_dot(h, w_ref[wi]) + b, 0.0)
            wi += 1
            h = _bn_train(y, g, be)

        # ----- final Linear, lane-dense (128-wide) unmasked store -----
        o_ref[...] = _dot(h, w_ref[wi]) + v_ref[_VEC["bf"]]

    return kernel


# ----------------- Parameter init (deterministic, PyTorch-like) -----------------
def _init_linear(key, fan_in, fan_out):
    k1, k2 = jax.random.split(key)
    bound = 1.0 / jnp.sqrt(jnp.float32(fan_in))
    w = jax.random.uniform(k1, (fan_in, fan_out), jnp.float32, -bound, bound)
    b = jax.random.uniform(k2, (1, fan_out), jnp.float32, -bound, bound)
    return w, b


def _init_bn(dim):
    return jnp.ones((1, dim), jnp.float32), jnp.zeros((1, dim), jnp.float32)


def init_params(key):
    h1 = 8 * ARCH_MUL        # hidden_size1 = 32
    h2 = 16 * ARCH_MUL       # hidden_size2 = 64
    h4 = 16 * ARCH_MUL       # hidden_size4 = 64
    h5 = 8 * ARCH_MUL        # hidden_size5 = 32
    E = EMBEDDING_DIM
    keys = jax.random.split(key, 11)

    embedding = jax.random.normal(keys[0], (BOTTLENECK_SIZE, E), jnp.float32)

    enc_dims = [(STATE_DIM, h1), (h1, h2), (h2, h2), (h2, h2), (h2, E)]
    encoder = []
    for i, (fi, fo) in enumerate(enc_dims):
        w, b = _init_linear(keys[1 + i], fi, fo)
        g, be = _init_bn(fo)
        encoder.append((w, b, g, be))

    dec_dims = [(2 * E, h4), (h4, h4), (h4, h4), (h4, h5)]
    decoder = []
    for i, (fi, fo) in enumerate(dec_dims):
        w, b = _init_linear(keys[6 + i], fi, fo)
        g, be = _init_bn(fo)
        decoder.append((w, b, g, be))

    dec_final = _init_linear(keys[10], h5, STATE_DIM)
    return embedding, encoder, decoder, dec_final


# ----------------- One-time parameter packing (hoisted out of the hot path) -----------------
def _pad_mat(w):
    fi, fo = w.shape
    return jnp.pad(w.astype(jnp.float32), ((0, LANES - fi), (0, LANES - fo)))


def _pad_row(v):
    v = jnp.asarray(v, jnp.float32).reshape(-1)
    return jnp.pad(v, (0, LANES - v.shape[0]))


def prepare_params(params):
    """Pack all parameters into 2 VMEM-friendly slabs + precompute the act-part block."""
    embedding, encoder, decoder, dec_final = params
    E = embedding.shape[1]
    phi_dim = encoder[-1][0].shape[1]
    assert E <= phi_dim
    rep = phi_dim // E                                   # == 1 here
    act1 = jnp.tile(embedding, (1, rep))                 # act1.repeat(1, rep)
    assert act1.shape[1] == phi_dim

    W1, b1, g1, be1 = decoder[0]
    W1_act, W1_phi = W1[:phi_dim], W1[phi_dim:]          # psi = [act1 | phi]
    # Parameter-only part of the first decoder layer, plus its bias.
    a_plus_b1 = jnp.dot(act1, W1_act,
                        precision=jax.lax.Precision.HIGHEST) + b1   # (K, h4)

    # ---- weight slab: 5 encoder + W1_phi + 3 decoder + final = 10 x (128,128) ----
    mats = [w for (w, _, _, _) in encoder] + [W1_phi] \
         + [w for (w, _, _, _) in decoder[1:]] + [dec_final[0]]
    w_slab = jnp.stack([_pad_mat(m) for m in mats])      # (10, 128, 128)

    # ---- vector slab: act-part block + every bias/gamma/beta row, 128-lane padded ----
    vec_rows = [jnp.zeros((LANES,), jnp.float32) for _ in range(_VEC["rows"])]
    ab_pad = jnp.pad(a_plus_b1, ((0, 0), (0, LANES - a_plus_b1.shape[1])))
    for k in range(BOTTLENECK_SIZE):
        vec_rows[_VEC["ab"] + k] = ab_pad[k]
    for i, (_, b, g, be) in enumerate(encoder):
        o = _VEC[f"enc{i}"]
        vec_rows[o], vec_rows[o + 1], vec_rows[o + 2] = _pad_row(b), _pad_row(g), _pad_row(be)
    o = _VEC["dec0"]
    vec_rows[o], vec_rows[o + 1] = _pad_row(g1), _pad_row(be1)
    for i in range(1, len(decoder)):
        _, b, g, be = decoder[i]
        o = _VEC[f"dec{i}"]
        vec_rows[o], vec_rows[o + 1], vec_rows[o + 2] = _pad_row(b), _pad_row(g), _pad_row(be)
    vec_rows[_VEC["bf"]] = _pad_row(dec_final[1])
    vec_slab = jnp.stack(vec_rows)                       # (40, 128)

    encoding = embedding                                 # embedding(arange(K)) == table
    return encoding, w_slab, vec_slab


# ----------------- ForwardModel.forward (fused kernel wrapper, hot path) -----------------
def forward_model(prepared, curr_states, next_states=None):
    # next_states is accepted but unused, matching the PyTorch forward.
    encoding, w_slab, vec_slab = prepared
    K = BOTTLENECK_SIZE
    N = curr_states.shape[0]
    NR = N * K
    assert NR % 8 == 0, "batch * bottleneck_size must be a multiple of 8"

    # Row-replicate each state K times (row r = n*K + k) and zero-pad features to
    # 128 lanes: the whole network stays lane-dense, every row is valid (no BN mask,
    # no padded-row garbage), and the O(N^2*K) selector matmul is unnecessary.
    x = curr_states.astype(jnp.float32)
    x_rep = jnp.repeat(x, K, axis=0)                          # (N*K, 24)
    x_in = jnp.pad(x_rep, ((0, 0), (0, LANES - x.shape[1])))  # (N*K, 128)

    kernel = _make_forward_kernel(n_tiles=N)
    vmem = pl.BlockSpec(memory_space=pltpu.MemorySpace.VMEM)
    out = pl.pallas_call(
        kernel,
        out_shape=jax.ShapeDtypeStruct((NR, LANES), jnp.float32),
        in_specs=[vmem, vmem, vmem],
        out_specs=vmem,
    )(x_in, w_slab, vec_slab)

    psi = out[:, :STATE_DIM].reshape(N, K, STATE_DIM)
    return psi, encoding


# ----------------- Pure-JAX reference (PyTorch-faithful, concat path) -----------------
def forward_model_reference(params, curr_states, next_states=None):
    embedding, encoder, decoder, dec_final = params
    P = jax.lax.Precision.HIGHEST

    def bn(y):
        mean = jnp.mean(y, axis=0, keepdims=True)
        var = jnp.mean((y - mean) ** 2, axis=0, keepdims=True)
        return (y - mean) * jax.lax.rsqrt(var + BN_EPS)

    def mlp(h, layers, final=None):
        for (w, b, g, be) in layers:
            y = jnp.maximum(jnp.dot(h, w, precision=P) + b, 0.0)
            h = bn(y) * g + be
        if final is not None:
            w, b = final
            h = jnp.dot(h, w, precision=P) + b
        return h

    encoding = embedding
    phi_k = mlp(curr_states.astype(jnp.float32), encoder)
    act1 = jnp.tile(encoding, (1, phi_k.shape[1] // encoding.shape[1]))
    N, _ = phi_k.shape
    K = act1.shape[0]
    act1_b = jnp.broadcast_to(act1[None, :, :], (N, K, act1.shape[1]))
    phi_b = jnp.broadcast_to(phi_k[:, None, :], (N, K, phi_k.shape[1]))
    psi = jnp.concatenate([act1_b, phi_b], axis=2).reshape(N * K, -1)
    psi = mlp(psi, decoder, dec_final)
    return psi.reshape(N, K, -1), encoding


# ----------------- Demo -----------------
if __name__ == "__main__":
    key = jax.random.PRNGKey(0)
    pkey, dkey1, dkey2 = jax.random.split(key, 3)
    params = init_params(pkey)
    prepared = prepare_params(params)      # one-time packing, outside the hot path

    # Small shapes: batch N=2, state dim 24 (fixed by the module's Linear(24, ...)).
    curr_states = jax.random.normal(dkey1, (2, STATE_DIM), jnp.float32)
    next_states = jax.random.normal(dkey2, (2, STATE_DIM), jnp.float32)

    fwd = jax.jit(forward_model)           # fuses the tiny wrapper ops around the kernel
    psi, encoding = fwd(prepared, curr_states, next_states)
    jax.block_until_ready((psi, encoding))

    assert psi.shape == (2, BOTTLENECK_SIZE, STATE_DIM), psi.shape
    assert encoding.shape == (BOTTLENECK_SIZE, EMBEDDING_DIM), encoding.shape
    assert psi.dtype == jnp.float32 and encoding.dtype == jnp.float32

    # Correctness vs. pure-JAX reference (tolerance covers the benign f32
    # reassociation from the split first decoder layer / replicated-row BN sums).
    psi_ref, enc_ref = forward_model_reference(params, curr_states, next_states)
    assert jnp.array_equal(encoding, enc_ref)
    max_err = float(jnp.max(jnp.abs(psi - psi_ref)))
    assert max_err < 2e-2, f"max abs error vs reference: {max_err}"

    print("KERNEL_OK")
</pallas_src>

<mosaic_0001>
module attributes {stable_mosaic.version = 11 : i64} {
  func.func @kernel(%arg0: memref<16x128xf32, #tpu.memory_space<vmem>>, %arg1: memref<10x128x128xf32, #tpu.memory_space<vmem>>, %arg2: memref<40x128xf32, #tpu.memory_space<vmem>>, %arg3: memref<16x128xf32, #tpu.memory_space<vmem>>) attributes {dimension_semantics = [], scalar_prefetch = 0 : i64, scratch_operands = 0 : i64, tpu.core_type = #tpu.core_type<tc>} {
    %c0 = arith.constant 0 : index
    %c0_0 = arith.constant 0 : index
    %0 = vector.load %arg0[%c0, %c0_0] : memref<16x128xf32, #tpu.memory_space<vmem>>, vector<16x128xf32>
    %c8 = arith.constant 8 : index
    %c0_1 = arith.constant 0 : index
    %1 = vector.load %arg2[%c8, %c0_1] : memref<40x128xf32, #tpu.memory_space<vmem>>, vector<1x128xf32>
    %2 = vector.shape_cast %1 : vector<1x128xf32> to vector<128xf32>
    %c9 = arith.constant 9 : index
    %c0_2 = arith.constant 0 : index
    %3 = vector.load %arg2[%c9, %c0_2] : memref<40x128xf32, #tpu.memory_space<vmem>>, vector<1x128xf32>
    %4 = vector.shape_cast %3 : vector<1x128xf32> to vector<128xf32>
    %c10 = arith.constant 10 : index
    %c0_3 = arith.constant 0 : index
    %5 = vector.load %arg2[%c10, %c0_3] : memref<40x128xf32, #tpu.memory_space<vmem>>, vector<1x128xf32>
    %6 = vector.shape_cast %5 : vector<1x128xf32> to vector<128xf32>
    %c0_4 = arith.constant 0 : index
    %c0_5 = arith.constant 0 : index
    %c0_6 = arith.constant 0 : index
    %7 = vector.load %arg1[%c0_4, %c0_5, %c0_6] : memref<10x128x128xf32, #tpu.memory_space<vmem>>, vector<1x128x128xf32>
    %8 = vector.shape_cast %7 : vector<1x128x128xf32> to vector<128x128xf32>
    %cst = arith.constant dense<0.000000e+00> : vector<16x128xf32>
    %9 = tpu.matmul %0, %8, %cst {dimension_numbers = #tpu.dot_dimension_numbers<[1], [0], [0], [1], [0, 0, 1, 1], [], []>} : vector<16x128xf32>, vector<128x128xf32>, vector<16x128xf32> -> vector<16x128xf32>
    %10 = vector.shape_cast %2 : vector<128xf32> to vector<1x128xf32>
    %11 = vector.broadcast %10 : vector<1x128xf32> to vector<16x128xf32>
    %12 = arith.addf %9, %11 : vector<16x128xf32>
    %cst_7 = arith.constant 0.000000e+00 : f32
    %13 = vector.broadcast %cst_7 : f32 to vector<16x128xf32>
    %14 = arith.maximumf %12, %13 : vector<16x128xf32>
    %cst_8 = arith.constant dense<0.000000e+00> : vector<128xf32>
    %15 = vector.multi_reduction <add>, %14, %cst_8 [0] : vector<16x128xf32> to vector<128xf32>
    %16 = vector.shape_cast %15 : vector<128xf32> to vector<1x128xf32>
    %cst_9 = arith.constant 1.600000e+01 : f32
    %17 = vector.broadcast %cst_9 : f32 to vector<1x128xf32>
    %18 = arith.divf %16, %17 : vector<1x128xf32>
    %19 = vector.broadcast %18 : vector<1x128xf32> to vector<16x128xf32>
    %20 = arith.subf %14, %19 : vector<16x128xf32>
    %21 = arith.mulf %20, %20 : vector<16x128xf32>
    %cst_10 = arith.constant dense<0.000000e+00> : vector<128xf32>
    %22 = vector.multi_reduction <add>, %21, %cst_10 [0] : vector<16x128xf32> to vector<128xf32>
    %23 = vector.shape_cast %22 : vector<128xf32> to vector<1x128xf32>
    %cst_11 = arith.constant 1.600000e+01 : f32
    %24 = vector.broadcast %cst_11 : f32 to vector<1x128xf32>
    %25 = arith.divf %23, %24 : vector<1x128xf32>
    %cst_12 = arith.constant 9.99999974E-6 : f32
    %26 = vector.broadcast %cst_12 : f32 to vector<1x128xf32>
    %27 = arith.addf %25, %26 : vector<1x128xf32>
    %28 = math.rsqrt %27 : vector<1x128xf32>
    %29 = vector.shape_cast %4 : vector<128xf32> to vector<1x128xf32>
    %30 = arith.mulf %28, %29 : vector<1x128xf32>
    %31 = vector.broadcast %30 : vector<1x128xf32> to vector<16x128xf32>
    %32 = arith.mulf %20, %31 : vector<16x128xf32>
    %33 = vector.shape_cast %6 : vector<128xf32> to vector<1x128xf32>
    %34 = vector.broadcast %33 : vector<1x128xf32> to vector<16x128xf32>
    %35 = arith.addf %32, %34 : vector<16x128xf32>
    %c11 = arith.constant 11 : index
    %c0_13 = arith.constant 0 : index
    %36 = vector.load %arg2[%c11, %c0_13] : memref<40x128xf32, #tpu.memory_space<vmem>>, vector<1x128xf32>
    %37 = vector.shape_cast %36 : vector<1x128xf32> to vector<128xf32>
    %c12 = arith.constant 12 : index
    %c0_14 = arith.constant 0 : index
    %38 = vector.load %arg2[%c12, %c0_14] : memref<40x128xf32, #tpu.memory_space<vmem>>, vector<1x128xf32>
    %39 = vector.shape_cast %38 : vector<1x128xf32> to vector<128xf32>
    %c13 = arith.constant 13 : index
    %c0_15 = arith.constant 0 : index
    %40 = vector.load %arg2[%c13, %c0_15] : memref<40x128xf32, #tpu.memory_space<vmem>>, vector<1x128xf32>
    %41 = vector.shape_cast %40 : vector<1x128xf32> to vector<128xf32>
    %c1 = arith.constant 1 : index
    %c0_16 = arith.constant 0 : index
    %c0_17 = arith.constant 0 : index
    %42 = vector.load %arg1[%c1, %c0_16, %c0_17] : memref<10x128x128xf32, #tpu.memory_space<vmem>>, vector<1x128x128xf32>
    %43 = vector.shape_cast %42 : vector<1x128x128xf32> to vector<128x128xf32>
    %cst_18 = arith.constant dense<0.000000e+00> : vector<16x128xf32>
    %44 = tpu.matmul %35, %43, %cst_18 {dimension_numbers = #tpu.dot_dimension_numbers<[1], [0], [0], [1], [0, 0, 1, 1], [], []>} : vector<16x128xf32>, vector<128x128xf32>, vector<16x128xf32> -> vector<16x128xf32>
    %45 = vector.shape_cast %37 : vector<128xf32> to vector<1x128xf32>
    %46 = vector.broadcast %45 : vector<1x128xf32> to vector<16x128xf32>
    %47 = arith.addf %44, %46 : vector<16x128xf32>
    %cst_19 = arith.constant 0.000000e+00 : f32
    %48 = vector.broadcast %cst_19 : f32 to vector<16x128xf32>
    %49 = arith.maximumf %47, %48 : vector<16x128xf32>
    %cst_20 = arith.constant dense<0.000000e+00> : vector<128xf32>
    %50 = vector.multi_reduction <add>, %49, %cst_20 [0] : vector<16x128xf32> to vector<128xf32>
    %51 = vector.shape_cast %50 : vector<128xf32> to vector<1x128xf32>
    %cst_21 = arith.constant 1.600000e+01 : f32
    %52 = vector.broadcast %cst_21 : f32 to vector<1x128xf32>
    %53 = arith.divf %51, %52 : vector<1x128xf32>
    %54 = vector.broadcast %53 : vector<1x128xf32> to vector<16x128xf32>
    %55 = arith.subf %49, %54 : vector<16x128xf32>
    %56 = arith.mulf %55, %55 : vector<16x128xf32>
    %cst_22 = arith.constant dense<0.000000e+00> : vector<128xf32>
    %57 = vector.multi_reduction <add>, %56, %cst_22 [0] : vector<16x128xf32> to vector<128xf32>
    %58 = vector.shape_cast %57 : vector<128xf32> to vector<1x128xf32>
    %cst_23 = arith.constant 1.600000e+01 : f32
    %59 = vector.broadcast %cst_23 : f32 to vector<1x128xf32>
    %60 = arith.divf %58, %59 : vector<1x128xf32>
    %cst_24 = arith.constant 9.99999974E-6 : f32
    %61 = vector.broadcast %cst_24 : f32 to vector<1x128xf32>
    %62 = arith.addf %60, %61 : vector<1x128xf32>
    %63 = math.rsqrt %62 : vector<1x128xf32>
    %64 = vector.shape_cast %39 : vector<128xf32> to vector<1x128xf32>
    %65 = arith.mulf %63, %64 : vector<1x128xf32>
    %66 = vector.broadcast %65 : vector<1x128xf32> to vector<16x128xf32>
    %67 = arith.mulf %55, %66 : vector<16x128xf32>
    %68 = vector.shape_cast %41 : vector<128xf32> to vector<1x128xf32>
    %69 = vector.broadcast %68 : vector<1x128xf32> to vector<16x128xf32>
    %70 = arith.addf %67, %69 : vector<16x128xf32>
    %c14 = arith.constant 14 : index
    %c0_25 = arith.constant 0 : index
    %71 = vector.load %arg2[%c14, %c0_25] : memref<40x128xf32, #tpu.memory_space<vmem>>, vector<1x128xf32>
    %72 = vector.shape_cast %71 : vector<1x128xf32> to vector<128xf32>
    %c15 = arith.constant 15 : index
    %c0_26 = arith.constant 0 : index
    %73 = vector.load %arg2[%c15, %c0_26] : memref<40x128xf32, #tpu.memory_space<vmem>>, vector<1x128xf32>
    %74 = vector.shape_cast %73 : vector<1x128xf32> to vector<128xf32>
    %c16 = arith.constant 16 : index
    %c0_27 = arith.constant 0 : index
    %75 = vector.load %arg2[%c16, %c0_27] : memref<40x128xf32, #tpu.memory_space<vmem>>, vector<1x128xf32>
    %76 = vector.shape_cast %75 : vector<1x128xf32> to vector<128xf32>
    %c2 = arith.constant 2 : index
    %c0_28 = arith.constant 0 : index
    %c0_29 = arith.constant 0 : index
    %77 = vector.load %arg1[%c2, %c0_28, %c0_29] : memref<10x128x128xf32, #tpu.memory_space<vmem>>, vector<1x128x128xf32>
    %78 = vector.shape_cast %77 : vector<1x128x128xf32> to vector<128x128xf32>
    %cst_30 = arith.constant dense<0.000000e+00> : vector<16x128xf32>
    %79 = tpu.matmul %70, %78, %cst_30 {dimension_numbers = #tpu.dot_dimension_numbers<[1], [0], [0], [1], [0, 0, 1, 1], [], []>} : vector<16x128xf32>, vector<128x128xf32>, vector<16x128xf32> -> vector<16x128xf32>
    %80 = vector.shape_cast %72 : vector<128xf32> to vector<1x128xf32>
    %81 = vector.broadcast %80 : vector<1x128xf32> to vector<16x128xf32>
    %82 = arith.addf %79, %81 : vector<16x128xf32>
    %cst_31 = arith.constant 0.000000e+00 : f32
    %83 = vector.broadcast %cst_31 : f32 to vector<16x128xf32>
    %84 = arith.maximumf %82, %83 : vector<16x128xf32>
    %cst_32 = arith.constant dense<0.000000e+00> : vector<128xf32>
    %85 = vector.multi_reduction <add>, %84, %cst_32 [0] : vector<16x128xf32> to vector<128xf32>
    %86 = vector.shape_cast %85 : vector<128xf32> to vector<1x128xf32>
    %cst_33 = arith.constant 1.600000e+01 : f32
    %87 = vector.broadcast %cst_33 : f32 to vector<1x128xf32>
    %88 = arith.divf %86, %87 : vector<1x128xf32>
    %89 = vector.broadcast %88 : vector<1x128xf32> to vector<16x128xf32>
    %90 = arith.subf %84, %89 : vector<16x128xf32>
    %91 = arith.mulf %90, %90 : vector<16x128xf32>
    %cst_34 = arith.constant dense<0.000000e+00> : vector<128xf32>
    %92 = vector.multi_reduction <add>, %91, %cst_34 [0] : vector<16x128xf32> to vector<128xf32>
    %93 = vector.shape_cast %92 : vector<128xf32> to vector<1x128xf32>
    %cst_35 = arith.constant 1.600000e+01 : f32
    %94 = vector.broadcast %cst_35 : f32 to vector<1x128xf32>
    %95 = arith.divf %93, %94 : vector<1x128xf32>
    %cst_36 = arith.constant 9.99999974E-6 : f32
    %96 = vector.broadcast %cst_36 : f32 to vector<1x128xf32>
    %97 = arith.addf %95, %96 : vector<1x128xf32>
    %98 = math.rsqrt %97 : vector<1x128xf32>
    %99 = vector.shape_cast %74 : vector<128xf32> to vector<1x128xf32>
    %100 = arith.mulf %98, %99 : vector<1x128xf32>
    %101 = vector.broadcast %100 : vector<1x128xf32> to vector<16x128xf32>
    %102 = arith.mulf %90, %101 : vector<16x128xf32>
    %103 = vector.shape_cast %76 : vector<128xf32> to vector<1x128xf32>
    %104 = vector.broadcast %103 : vector<1x128xf32> to vector<16x128xf32>
    %105 = arith.addf %102, %104 : vector<16x128xf32>
    %c17 = arith.constant 17 : index
    %c0_37 = arith.constant 0 : index
    %106 = vector.load %arg2[%c17, %c0_37] : memref<40x128xf32, #tpu.memory_space<vmem>>, vector<1x128xf32>
    %107 = vector.shape_cast %106 : vector<1x128xf32> to vector<128xf32>
    %c18 = arith.constant 18 : index
    %c0_38 = arith.constant 0 : index
    %108 = vector.load %arg2[%c18, %c0_38] : memref<40x128xf32, #tpu.memory_space<vmem>>, vector<1x128xf32>
    %109 = vector.shape_cast %108 : vector<1x128xf32> to vector<128xf32>
    %c19 = arith.constant 19 : index
    %c0_39 = arith.constant 0 : index
    %110 = vector.load %arg2[%c19, %c0_39] : memref<40x128xf32, #tpu.memory_space<vmem>>, vector<1x128xf32>
    %111 = vector.shape_cast %110 : vector<1x128xf32> to vector<128xf32>
    %c3 = arith.constant 3 : index
    %c0_40 = arith.constant 0 : index
    %c0_41 = arith.constant 0 : index
    %112 = vector.load %arg1[%c3, %c0_40, %c0_41] : memref<10x128x128xf32, #tpu.memory_space<vmem>>, vector<1x128x128xf32>
    %113 = vector.shape_cast %112 : vector<1x128x128xf32> to vector<128x128xf32>
    %cst_42 = arith.constant dense<0.000000e+00> : vector<16x128xf32>
    %114 = tpu.matmul %105, %113, %cst_42 {dimension_numbers = #tpu.dot_dimension_numbers<[1], [0], [0], [1], [0, 0, 1, 1], [], []>} : vector<16x128xf32>, vector<128x128xf32>, vector<16x128xf32> -> vector<16x128xf32>
    %115 = vector.shape_cast %107 : vector<128xf32> to vector<1x128xf32>
    %116 = vector.broadcast %115 : vector<1x128xf32> to vector<16x128xf32>
    %117 = arith.addf %114, %116 : vector<16x128xf32>
    %cst_43 = arith.constant 0.000000e+00 : f32
    %118 = vector.broadcast %cst_43 : f32 to vector<16x128xf32>
    %119 = arith.maximumf %117, %118 : vector<16x128xf32>
    %cst_44 = arith.constant dense<0.000000e+00> : vector<128xf32>
    %120 = vector.multi_reduction <add>, %119, %cst_44 [0] : vector<16x128xf32> to vector<128xf32>
    %121 = vector.shape_cast %120 : vector<128xf32> to vector<1x128xf32>
    %cst_45 = arith.constant 1.600000e+01 : f32
    %122 = vector.broadcast %cst_45 : f32 to vector<1x128xf32>
    %123 = arith.divf %121, %122 : vector<1x128xf32>
    %124 = vector.broadcast %123 : vector<1x128xf32> to vector<16x128xf32>
    %125 = arith.subf %119, %124 : vector<16x128xf32>
    %126 = arith.mulf %125, %125 : vector<16x128xf32>
    %cst_46 = arith.constant dense<0.000000e+00> : vector<128xf32>
    %127 = vector.multi_reduction <add>, %126, %cst_46 [0] : vector<16x128xf32> to vector<128xf32>
    %128 = vector.shape_cast %127 : vector<128xf32> to vector<1x128xf32>
    %cst_47 = arith.constant 1.600000e+01 : f32
    %129 = vector.broadcast %cst_47 : f32 to vector<1x128xf32>
    %130 = arith.divf %128, %129 : vector<1x128xf32>
    %cst_48 = arith.constant 9.99999974E-6 : f32
    %131 = vector.broadcast %cst_48 : f32 to vector<1x128xf32>
    %132 = arith.addf %130, %131 : vector<1x128xf32>
    %133 = math.rsqrt %132 : vector<1x128xf32>
    %134 = vector.shape_cast %109 : vector<128xf32> to vector<1x128xf32>
    %135 = arith.mulf %133, %134 : vector<1x128xf32>
    %136 = vector.broadcast %135 : vector<1x128xf32> to vector<16x128xf32>
    %137 = arith.mulf %125, %136 : vector<16x128xf32>
    %138 = vector.shape_cast %111 : vector<128xf32> to vector<1x128xf32>
    %139 = vector.broadcast %138 : vector<1x128xf32> to vector<16x128xf32>
    %140 = arith.addf %137, %139 : vector<16x128xf32>
    %c20 = arith.constant 20 : index
    %c0_49 = arith.constant 0 : index
    %141 = vector.load %arg2[%c20, %c0_49] : memref<40x128xf32, #tpu.memory_space<vmem>>, vector<1x128xf32>
    %142 = vector.shape_cast %141 : vector<1x128xf32> to vector<128xf32>
    %c21 = arith.constant 21 : index
    %c0_50 = arith.constant 0 : index
    %143 = vector.load %arg2[%c21, %c0_50] : memref<40x128xf32, #tpu.memory_space<vmem>>, vector<1x128xf32>
    %144 = vector.shape_cast %143 : vector<1x128xf32> to vector<128xf32>
    %c22 = arith.constant 22 : index
    %c0_51 = arith.constant 0 : index
    %145 = vector.load %arg2[%c22, %c0_51] : memref<40x128xf32, #tpu.memory_space<vmem>>, vector<1x128xf32>
    %146 = vector.shape_cast %145 : vector<1x128xf32> to vector<128xf32>
    %c4 = arith.constant 4 : index
    %c0_52 = arith.constant 0 : index
    %c0_53 = arith.constant 0 : index
    %147 = vector.load %arg1[%c4, %c0_52, %c0_53] : memref<10x128x128xf32, #tpu.memory_space<vmem>>, vector<1x128x128xf32>
    %148 = vector.shape_cast %147 : vector<1x128x128xf32> to vector<128x128xf32>
    %cst_54 = arith.constant dense<0.000000e+00> : vector<16x128xf32>
    %149 = tpu.matmul %140, %148, %cst_54 {dimension_numbers = #tpu.dot_dimension_numbers<[1], [0], [0], [1], [0, 0, 1, 1], [], []>} : vector<16x128xf32>, vector<128x128xf32>, vector<16x128xf32> -> vector<16x128xf32>
    %150 = vector.shape_cast %142 : vector<128xf32> to vector<1x128xf32>
    %151 = vector.broadcast %150 : vector<1x128xf32> to vector<16x128xf32>
    %152 = arith.addf %149, %151 : vector<16x128xf32>
    %cst_55 = arith.constant 0.000000e+00 : f32
    %153 = vector.broadcast %cst_55 : f32 to vector<16x128xf32>
    %154 = arith.maximumf %152, %153 : vector<16x128xf32>
    %cst_56 = arith.constant dense<0.000000e+00> : vector<128xf32>
    %155 = vector.multi_reduction <add>, %154, %cst_56 [0] : vector<16x128xf32> to vector<128xf32>
    %156 = vector.shape_cast %155 : vector<128xf32> to vector<1x128xf32>
    %cst_57 = arith.constant 1.600000e+01 : f32
    %157 = vector.broadcast %cst_57 : f32 to vector<1x128xf32>
    %158 = arith.divf %156, %157 : vector<1x128xf32>
    %159 = vector.broadcast %158 : vector<1x128xf32> to vector<16x128xf32>
    %160 = arith.subf %154, %159 : vector<16x128xf32>
    %161 = arith.mulf %160, %160 : vector<16x128xf32>
    %cst_58 = arith.constant dense<0.000000e+00> : vector<128xf32>
    %162 = vector.multi_reduction <add>, %161, %cst_58 [0] : vector<16x128xf32> to vector<128xf32>
    %163 = vector.shape_cast %162 : vector<128xf32> to vector<1x128xf32>
    %cst_59 = arith.constant 1.600000e+01 : f32
    %164 = vector.broadcast %cst_59 : f32 to vector<1x128xf32>
    %165 = arith.divf %163, %164 : vector<1x128xf32>
    %cst_60 = arith.constant 9.99999974E-6 : f32
    %166 = vector.broadcast %cst_60 : f32 to vector<1x128xf32>
    %167 = arith.addf %165, %166 : vector<1x128xf32>
    %168 = math.rsqrt %167 : vector<1x128xf32>
    %169 = vector.shape_cast %144 : vector<128xf32> to vector<1x128xf32>
    %170 = arith.mulf %168, %169 : vector<1x128xf32>
    %171 = vector.broadcast %170 : vector<1x128xf32> to vector<16x128xf32>
    %172 = arith.mulf %160, %171 : vector<16x128xf32>
    %173 = vector.shape_cast %146 : vector<128xf32> to vector<1x128xf32>
    %174 = vector.broadcast %173 : vector<1x128xf32> to vector<16x128xf32>
    %175 = arith.addf %172, %174 : vector<16x128xf32>
    %c0_61 = arith.constant 0 : index
    %c0_62 = arith.constant 0 : index
    %176 = vector.load %arg2[%c0_61, %c0_62] : memref<40x128xf32, #tpu.memory_space<vmem>>, vector<8x128xf32>
    %177 = tpu.concatenate %176, %176 in 0 : vector<8x128xf32>, vector<8x128xf32> -> vector<16x128xf32>
    %c5 = arith.constant 5 : index
    %c0_63 = arith.constant 0 : index
    %c0_64 = arith.constant 0 : index
    %178 = vector.load %arg1[%c5, %c0_63, %c0_64] : memref<10x128x128xf32, #tpu.memory_space<vmem>>, vector<1x128x128xf32>
    %179 = vector.shape_cast %178 : vector<1x128x128xf32> to vector<128x128xf32>
    %cst_65 = arith.constant dense<0.000000e+00> : vector<16x128xf32>
    %180 = tpu.matmul %175, %179, %cst_65 {dimension_numbers = #tpu.dot_dimension_numbers<[1], [0], [0], [1], [0, 0, 1, 1], [], []>} : vector<16x128xf32>, vector<128x128xf32>, vector<16x128xf32> -> vector<16x128xf32>
    %181 = arith.addf %180, %177 : vector<16x128xf32>
    %cst_66 = arith.constant 0.000000e+00 : f32
    %182 = vector.broadcast %cst_66 : f32 to vector<16x128xf32>
    %183 = arith.maximumf %181, %182 : vector<16x128xf32>
    %c23 = arith.constant 23 : index
    %c0_67 = arith.constant 0 : index
    %184 = vector.load %arg2[%c23, %c0_67] : memref<40x128xf32, #tpu.memory_space<vmem>>, vector<1x128xf32>
    %185 = vector.shape_cast %184 : vector<1x128xf32> to vector<128xf32>
    %c24 = arith.constant 24 : index
    %c0_68 = arith.constant 0 : index
    %186 = vector.load %arg2[%c24, %c0_68] : memref<40x128xf32, #tpu.memory_space<vmem>>, vector<1x128xf32>
    %187 = vector.shape_cast %186 : vector<1x128xf32> to vector<128xf32>
    %cst_69 = arith.constant dense<0.000000e+00> : vector<128xf32>
    %188 = vector.multi_reduction <add>, %183, %cst_69 [0] : vector<16x128xf32> to vector<128xf32>
    %189 = vector.shape_cast %188 : vector<128xf32> to vector<1x128xf32>
    %cst_70 = arith.constant 1.600000e+01 : f32
    %190 = vector.broadcast %cst_70 : f32 to vector<1x128xf32>
    %191 = arith.divf %189, %190 : vector<1x128xf32>
    %192 = vector.broadcast %191 : vector<1x128xf32> to vector<16x128xf32>
    %193 = arith.subf %183, %192 : vector<16x128xf32>
    %194 = arith.mulf %193, %193 : vector<16x128xf32>
    %cst_71 = arith.constant dense<0.000000e+00> : vector<128xf32>
    %195 = vector.multi_reduction <add>, %194, %cst_71 [0] : vector<16x128xf32> to vector<128xf32>
    %196 = vector.shape_cast %195 : vector<128xf32> to vector<1x128xf32>
    %cst_72 = arith.constant 1.600000e+01 : f32
    %197 = vector.broadcast %cst_72 : f32 to vector<1x128xf32>
    %198 = arith.divf %196, %197 : vector<1x128xf32>
    %cst_73 = arith.constant 9.99999974E-6 : f32
    %199 = vector.broadcast %cst_73 : f32 to vector<1x128xf32>
    %200 = arith.addf %198, %199 : vector<1x128xf32>
    %201 = math.rsqrt %200 : vector<1x128xf32>
    %202 = vector.shape_cast %185 : vector<128xf32> to vector<1x128xf32>
    %203 = arith.mulf %201, %202 : vector<1x128xf32>
    %204 = vector.broadcast %203 : vector<1x128xf32> to vector<16x128xf32>
    %205 = arith.mulf %193, %204 : vector<16x128xf32>
    %206 = vector.shape_cast %187 : vector<128xf32> to vector<1x128xf32>
    %207 = vector.broadcast %206 : vector<1x128xf32> to vector<16x128xf32>
    %208 = arith.addf %205, %207 : vector<16x128xf32>
    %c25 = arith.constant 25 : index
    %c0_74 = arith.constant 0 : index
    %209 = vector.load %arg2[%c25, %c0_74] : memref<40x128xf32, #tpu.memory_space<vmem>>, vector<1x128xf32>
    %210 = vector.shape_cast %209 : vector<1x128xf32> to vector<128xf32>
    %c26 = arith.constant 26 : index
    %c0_75 = arith.constant 0 : index
    %211 = vector.load %arg2[%c26, %c0_75] : memref<40x128xf32, #tpu.memory_space<vmem>>, vector<1x128xf32>
    %212 = vector.shape_cast %211 : vector<1x128xf32> to vector<128xf32>
    %c27 = arith.constant 27 : index
    %c0_76 = arith.constant 0 : index
    %213 = vector.load %arg2[%c27, %c0_76] : memref<40x128xf32, #tpu.memory_space<vmem>>, vector<1x128xf32>
    %214 = vector.shape_cast %213 : vector<1x128xf32> to vector<128xf32>
    %c6 = arith.constant 6 : index
    %c0_77 = arith.constant 0 : index
    %c0_78 = arith.constant 0 : index
    %215 = vector.load %arg1[%c6, %c0_77, %c0_78] : memref<10x128x128xf32, #tpu.memory_space<vmem>>, vector<1x128x128xf32>
    %216 = vector.shape_cast %215 : vector<1x128x128xf32> to vector<128x128xf32>
    %cst_79 = arith.constant dense<0.000000e+00> : vector<16x128xf32>
    %217 = tpu.matmul %208, %216, %cst_79 {dimension_numbers = #tpu.dot_dimension_numbers<[1], [0], [0], [1], [0, 0, 1, 1], [], []>} : vector<16x128xf32>, vector<128x128xf32>, vector<16x128xf32> -> vector<16x128xf32>
    %218 = vector.shape_cast %210 : vector<128xf32> to vector<1x128xf32>
    %219 = vector.broadcast %218 : vector<1x128xf32> to vector<16x128xf32>
    %220 = arith.addf %217, %219 : vector<16x128xf32>
    %cst_80 = arith.constant 0.000000e+00 : f32
    %221 = vector.broadcast %cst_80 : f32 to vector<16x128xf32>
    %222 = arith.maximumf %220, %221 : vector<16x128xf32>
    %cst_81 = arith.constant dense<0.000000e+00> : vector<128xf32>
    %223 = vector.multi_reduction <add>, %222, %cst_81 [0] : vector<16x128xf32> to vector<128xf32>
    %224 = vector.shape_cast %223 : vector<128xf32> to vector<1x128xf32>
    %cst_82 = arith.constant 1.600000e+01 : f32
    %225 = vector.broadcast %cst_82 : f32 to vector<1x128xf32>
    %226 = arith.divf %224, %225 : vector<1x128xf32>
    %227 = vector.broadcast %226 : vector<1x128xf32> to vector<16x128xf32>
    %228 = arith.subf %222, %227 : vector<16x128xf32>
    %229 = arith.mulf %228, %228 : vector<16x128xf32>
    %cst_83 = arith.constant dense<0.000000e+00> : vector<128xf32>
    %230 = vector.multi_reduction <add>, %229, %cst_83 [0] : vector<16x128xf32> to vector<128xf32>
    %231 = vector.shape_cast %230 : vector<128xf32> to vector<1x128xf32>
    %cst_84 = arith.constant 1.600000e+01 : f32
    %232 = vector.broadcast %cst_84 : f32 to vector<1x128xf32>
    %233 = arith.divf %231, %232 : vector<1x128xf32>
    %cst_85 = arith.constant 9.99999974E-6 : f32
    %234 = vector.broadcast %cst_85 : f32 to vector<1x128xf32>
    %235 = arith.addf %233, %234 : vector<1x128xf32>
    %236 = math.rsqrt %235 : vector<1x128xf32>
    %237 = vector.shape_cast %212 : vector<128xf32> to vector<1x128xf32>
    %238 = arith.mulf %236, %237 : vector<1x128xf32>
    %239 = vector.broadcast %238 : vector<1x128xf32> to vector<16x128xf32>
    %240 = arith.mulf %228, %239 : vector<16x128xf32>
    %241 = vector.shape_cast %214 : vector<128xf32> to vector<1x128xf32>
    %242 = vector.broadcast %241 : vector<1x128xf32> to vector<16x128xf32>
    %243 = arith.addf %240, %242 : vector<16x128xf32>
    %c28 = arith.constant 28 : index
    %c0_86 = arith.constant 0 : index
    %244 = vector.load %arg2[%c28, %c0_86] : memref<40x128xf32, #tpu.memory_space<vmem>>, vector<1x128xf32>
    %245 = vector.shape_cast %244 : vector<1x128xf32> to vector<128xf32>
    %c29 = arith.constant 29 : index
    %c0_87 = arith.constant 0 : index
    %246 = vector.load %arg2[%c29, %c0_87] : memref<40x128xf32, #tpu.memory_space<vmem>>, vector<1x128xf32>
    %247 = vector.shape_cast %246 : vector<1x128xf32> to vector<128xf32>
    %c30 = arith.constant 30 : index
    %c0_88 = arith.constant 0 : index
    %248 = vector.load %arg2[%c30, %c0_88] : memref<40x128xf32, #tpu.memory_space<vmem>>, vector<1x128xf32>
    %249 = vector.shape_cast %248 : vector<1x128xf32> to vector<128xf32>
    %c7 = arith.constant 7 : index
    %c0_89 = arith.constant 0 : index
    %c0_90 = arith.constant 0 : index
    %250 = vector.load %arg1[%c7, %c0_89, %c0_90] : memref<10x128x128xf32, #tpu.memory_space<vmem>>, vector<1x128x128xf32>
    %251 = vector.shape_cast %250 : vector<1x128x128xf32> to vector<128x128xf32>
    %cst_91 = arith.constant dense<0.000000e+00> : vector<16x128xf32>
    %252 = tpu.matmul %243, %251, %cst_91 {dimension_numbers = #tpu.dot_dimension_numbers<[1], [0], [0], [1], [0, 0, 1, 1], [], []>} : vector<16x128xf32>, vector<128x128xf32>, vector<16x128xf32> -> vector<16x128xf32>
    %253 = vector.shape_cast %245 : vector<128xf32> to vector<1x128xf32>
    %254 = vector.broadcast %253 : vector<1x128xf32> to vector<16x128xf32>
    %255 = arith.addf %252, %254 : vector<16x128xf32>
    %cst_92 = arith.constant 0.000000e+00 : f32
    %256 = vector.broadcast %cst_92 : f32 to vector<16x128xf32>
    %257 = arith.maximumf %255, %256 : vector<16x128xf32>
    %cst_93 = arith.constant dense<0.000000e+00> : vector<128xf32>
    %258 = vector.multi_reduction <add>, %257, %cst_93 [0] : vector<16x128xf32> to vector<128xf32>
    %259 = vector.shape_cast %258 : vector<128xf32> to vector<1x128xf32>
    %cst_94 = arith.constant 1.600000e+01 : f32
    %260 = vector.broadcast %cst_94 : f32 to vector<1x128xf32>
    %261 = arith.divf %259, %260 : vector<1x128xf32>
    %262 = vector.broadcast %261 : vector<1x128xf32> to vector<16x128xf32>
    %263 = arith.subf %257, %262 : vector<16x128xf32>
    %264 = arith.mulf %263, %263 : vector<16x128xf32>
    %cst_95 = arith.constant dense<0.000000e+00> : vector<128xf32>
    %265 = vector.multi_reduction <add>, %264, %cst_95 [0] : vector<16x128xf32> to vector<128xf32>
    %266 = vector.shape_cast %265 : vector<128xf32> to vector<1x128xf32>
    %cst_96 = arith.constant 1.600000e+01 : f32
    %267 = vector.broadcast %cst_96 : f32 to vector<1x128xf32>
    %268 = arith.divf %266, %267 : vector<1x128xf32>
    %cst_97 = arith.constant 9.99999974E-6 : f32
    %269 = vector.broadcast %cst_97 : f32 to vector<1x128xf32>
    %270 = arith.addf %268, %269 : vector<1x128xf32>
    %271 = math.rsqrt %270 : vector<1x128xf32>
    %272 = vector.shape_cast %247 : vector<128xf32> to vector<1x128xf32>
    %273 = arith.mulf %271, %272 : vector<1x128xf32>
    %274 = vector.broadcast %273 : vector<1x128xf32> to vector<16x128xf32>
    %275 = arith.mulf %263, %274 : vector<16x128xf32>
    %276 = vector.shape_cast %249 : vector<128xf32> to vector<1x128xf32>
    %277 = vector.broadcast %276 : vector<1x128xf32> to vector<16x128xf32>
    %278 = arith.addf %275, %277 : vector<16x128xf32>
    %c31 = arith.constant 31 : index
    %c0_98 = arith.constant 0 : index
    %279 = vector.load %arg2[%c31, %c0_98] : memref<40x128xf32, #tpu.memory_space<vmem>>, vector<1x128xf32>
    %280 = vector.shape_cast %279 : vector<1x128xf32> to vector<128xf32>
    %c32 = arith.constant 32 : index
    %c0_99 = arith.constant 0 : index
    %281 = vector.load %arg2[%c32, %c0_99] : memref<40x128xf32, #tpu.memory_space<vmem>>, vector<1x128xf32>
    %282 = vector.shape_cast %281 : vector<1x128xf32> to vector<128xf32>
    %c33 = arith.constant 33 : index
    %c0_100 = arith.constant 0 : index
    %283 = vector.load %arg2[%c33, %c0_100] : memref<40x128xf32, #tpu.memory_space<vmem>>, vector<1x128xf32>
    %284 = vector.shape_cast %283 : vector<1x128xf32> to vector<128xf32>
    %c8_101 = arith.constant 8 : index
    %c0_102 = arith.constant 0 : index
    %c0_103 = arith.constant 0 : index
    %285 = vector.load %arg1[%c8_101, %c0_102, %c0_103] : memref<10x128x128xf32, #tpu.memory_space<vmem>>, vector<1x128x128xf32>
    %286 = vector.shape_cast %285 : vector<1x128x128xf32> to vector<128x128xf32>
    %cst_104 = arith.constant dense<0.000000e+00> : vector<16x128xf32>
    %287 = tpu.matmul %278, %286, %cst_104 {dimension_numbers = #tpu.dot_dimension_numbers<[1], [0], [0], [1], [0, 0, 1, 1], [], []>} : vector<16x128xf32>, vector<128x128xf32>, vector<16x128xf32> -> vector<16x128xf32>
    %288 = vector.shape_cast %280 : vector<128xf32> to vector<1x128xf32>
    %289 = vector.broadcast %288 : vector<1x128xf32> to vector<16x128xf32>
    %290 = arith.addf %287, %289 : vector<16x128xf32>
    %cst_105 = arith.constant 0.000000e+00 : f32
    %291 = vector.broadcast %cst_105 : f32 to vector<16x128xf32>
    %292 = arith.maximumf %290, %291 : vector<16x128xf32>
    %cst_106 = arith.constant dense<0.000000e+00> : vector<128xf32>
    %293 = vector.multi_reduction <add>, %292, %cst_106 [0] : vector<16x128xf32> to vector<128xf32>
    %294 = vector.shape_cast %293 : vector<128xf32> to vector<1x128xf32>
    %cst_107 = arith.constant 1.600000e+01 : f32
    %295 = vector.broadcast %cst_107 : f32 to vector<1x128xf32>
    %296 = arith.divf %294, %295 : vector<1x128xf32>
    %297 = vector.broadcast %296 : vector<1x128xf32> to vector<16x128xf32>
    %298 = arith.subf %292, %297 : vector<16x128xf32>
    %299 = arith.mulf %298, %298 : vector<16x128xf32>
    %cst_108 = arith.constant dense<0.000000e+00> : vector<128xf32>
    %300 = vector.multi_reduction <add>, %299, %cst_108 [0] : vector<16x128xf32> to vector<128xf32>
    %301 = vector.shape_cast %300 : vector<128xf32> to vector<1x128xf32>
    %cst_109 = arith.constant 1.600000e+01 : f32
    %302 = vector.broadcast %cst_109 : f32 to vector<1x128xf32>
    %303 = arith.divf %301, %302 : vector<1x128xf32>
    %cst_110 = arith.constant 9.99999974E-6 : f32
    %304 = vector.broadcast %cst_110 : f32 to vector<1x128xf32>
    %305 = arith.addf %303, %304 : vector<1x128xf32>
    %306 = math.rsqrt %305 : vector<1x128xf32>
    %307 = vector.shape_cast %282 : vector<128xf32> to vector<1x128xf32>
    %308 = arith.mulf %306, %307 : vector<1x128xf32>
    %309 = vector.broadcast %308 : vector<1x128xf32> to vector<16x128xf32>
    %310 = arith.mulf %298, %309 : vector<16x128xf32>
    %311 = vector.shape_cast %284 : vector<128xf32> to vector<1x128xf32>
    %312 = vector.broadcast %311 : vector<1x128xf32> to vector<16x128xf32>
    %313 = arith.addf %310, %312 : vector<16x128xf32>
    %c9_111 = arith.constant 9 : index
    %c0_112 = arith.constant 0 : index
    %c0_113 = arith.constant 0 : index
    %314 = vector.load %arg1[%c9_111, %c0_112, %c0_113] : memref<10x128x128xf32, #tpu.memory_space<vmem>>, vector<1x128x128xf32>
    %315 = vector.shape_cast %314 : vector<1x128x128xf32> to vector<128x128xf32>
    %cst_114 = arith.constant dense<0.000000e+00> : vector<16x128xf32>
    %316 = tpu.matmul %313, %315, %cst_114 {dimension_numbers = #tpu.dot_dimension_numbers<[1], [0], [0], [1], [0, 0, 1, 1], [], []>} : vector<16x128xf32>, vector<128x128xf32>, vector<16x128xf32> -> vector<16x128xf32>
    %c34 = arith.constant 34 : index
    %c0_115 = arith.constant 0 : index
    %317 = vector.load %arg2[%c34, %c0_115] : memref<40x128xf32, #tpu.memory_space<vmem>>, vector<1x128xf32>
    %318 = vector.shape_cast %317 : vector<1x128xf32> to vector<128xf32>
    %319 = vector.shape_cast %318 : vector<128xf32> to vector<1x128xf32>
    %320 = vector.broadcast %319 : vector<1x128xf32> to vector<16x128xf32>
    %321 = arith.addf %316, %320 : vector<16x128xf32>
    %c0_116 = arith.constant 0 : index
    %c0_117 = arith.constant 0 : index
    %322 = vector.load %arg3[%c0_116, %c0_117] : memref<16x128xf32, #tpu.memory_space<vmem>>, vector<16x128xf32>
    tpu.vector_store %arg3[%c0_116, %c0_117], %321 {strides = array<i32>} : memref<16x128xf32, #tpu.memory_space<vmem>>, vector<16x128xf32>,
    return
  }
}

</mosaic_0001>

<llo_original>
// kernel: forward_model.1
$region0: #{forward_model.1}
  #allocation0 [shape = 'u32[]', space=smem, size = 0x4, offset = 0x4, fixed_abs, tag = 'smem constant byte address 0x4 - core index']
  #allocation1 [shape = 'u32[144,128]{1,0:T(1,128)}', space=vmem, size = 0x12000, scoped, tag = 'internal scratch']
  %s0 = inlined_call_operand.vmem [shape: f32[16,128], index: 0, kind: input, shape index: {}]
  %s1 = inlined_call_operand.hbm [shape: f32[10,128,128], index: 1, kind: input, shape index: {}]
  %s2 = inlined_call_operand.vmem [shape: f32[40,128], index: 2, kind: input, shape index: {}]
  %s3 = inlined_call_operand.vmem [shape: f32[16,128], index: 3, kind: output, shape index: {}]
  %s4 = sld [smem:[#allocation0]]
  $region26: #{forward_model.1} parent=0
    _
  %s6 = ssub.s32 1, %s4
  %s7 = scalar_select 0, %s6, %s4
  $region1: #{forward_model.1} parent=0
    #allocation2 [shape = 'u8[655360]{0}', space=vmem, size = 0xa0000, scoped, tag = 'input window, operand 1, single buffered']
    #allocation3 [shape = 's32[1]{0}', space=sflag, size = 0x4, scoped, tag = 'scoped memory for forward_model.1']
    %8 = vsyncpa [#allocation3], 0
    // Predicated region
    $region2: #{forward_model.1} parent=1 // pred_check
      _
    $region3: #{forward_model.1} parent=1 // pred_check_branch
      %10 = sbr.rel (0) target = $region5
    $region4: #{forward_model.1} parent=1 // pred_region
      _
    $region5: #{forward_model.1} parent=1 // pred_fallthru
      _
    // Predicated region
    $region6: #{forward_model.1} parent=1 // pred_check
      _
    $region7: #{forward_model.1} parent=1 // pred_check_branch
      %12 = sbr.rel (0) target = $region9
    $region8: #{forward_model.1} parent=1 // pred_region
      %s14 = ssub.s32 20480, 20480
      %15 = vsyncadd [#allocation3], %s14
      %s16 = sshll.u32 [#allocation2], 4
      %s17 = int_to_ptr.vmem [resolvable:$true] %s16
      %22 = dma.hbm_to_vmem [thread:$0]  %s1, 20480, %s17, [#allocation3], 128, 128, 8
    $region9: #{forward_model.1} parent=1 // pred_fallthru
      _
    // Predicated region
    $region10: #{forward_model.1} parent=1 // pred_check
      _
    $region11: #{forward_model.1} parent=1 // pred_check_branch
      %24 = sbr.rel (0) target = $region13
    $region12: #{forward_model.1} parent=1 // pred_region
      _
    $region13: #{forward_model.1} parent=1 // pred_fallthru
      _
    // Predicated region
    $region14: #{forward_model.1} parent=1 // pred_check
      _
    $region15: #{forward_model.1} parent=1 // pred_check_branch
      %26 = sbr.rel (0) target = $region17
    $region16: #{forward_model.1} parent=1 // pred_region
      %27 = dma.done [#allocation3], 20480
    $region17: #{forward_model.1} parent=1 // pred_fallthru
      _
    %v28 = vld [vmem:[%s0] sm:$0xff]
    %v29 = vld [vmem:[%s0 + $0x8] sm:$0xff]
    %v30 = vld [vmem:[%s2 + $0x8] sm:$0x1]
    %v31 = vld [vmem:[%s2 + $0x9] sm:$0x1]
    %v32 = vld [vmem:[%s2 + $0xa] sm:$0x1]
    %v33 = vld [vmem:[#allocation2] sm:$0xff]
    %v34 = vld [vmem:[#allocation2 + $0x8] sm:$0xff]
    %v35 = vld [vmem:[#allocation2 + $0x10] sm:$0xff]
    %v36 = vld [vmem:[#allocation2 + $0x18] sm:$0xff]
    %v37 = vld [vmem:[#allocation2 + $0x20] sm:$0xff]
    %v38 = vld [vmem:[#allocation2 + $0x28] sm:$0xff]
    %v39 = vld [vmem:[#allocation2 + $0x30] sm:$0xff]
    %v40 = vld [vmem:[#allocation2 + $0x38] sm:$0xff]
    %v41 = vld [vmem:[#allocation2 + $0x40] sm:$0xff]
    %v42 = vld [vmem:[#allocation2 + $0x48] sm:$0xff]
    %v43 = vld [vmem:[#allocation2 + $0x50] sm:$0xff]
    %v44 = vld [vmem:[#allocation2 + $0x58] sm:$0xff]
    %v45 = vld [vmem:[#allocation2 + $0x60] sm:$0xff]
    %v46 = vld [vmem:[#allocation2 + $0x68] sm:$0xff]
    %v47 = vld [vmem:[#allocation2 + $0x70] sm:$0xff]
    %v48 = vld [vmem:[#allocation2 + $0x78] sm:$0xff]
    %v49 = vlaneseq
    %v50 = vshrl.u32 %v49, 7
    %v51 = vsub.s32 0, %v50
    %v52 = vrot.slane %v30, %v51
    %53 = vmatprep.subr.mxu0 0.0
    %54 = vmatpush1.msra.mxu0 %v33
    %55 = vmatprep.subr.mxu0 0.0
    %56 = vmatpush1.msra.mxu0 %v34
    %57 = vmatprep.subr.mxu0 0.0
    %58 = vmatpush1.msra.mxu0 %v35
    %59 = vmatprep.subr.mxu0 0.0
    %60 = vmatpush1.msra.mxu0 %v36
    %61 = vmatprep.subr.mxu0 0.0
    %62 = vmatpush1.msra.mxu0 %v37
    %63 = vmatprep.subr.mxu0 0.0
    %64 = vmatpush1.msra.mxu0 %v38
    %65 = vmatprep.subr.mxu0 0.0
    %66 = vmatpush1.msra.mxu0 %v39
    %67 = vmatprep.subr.mxu0 0.0
    %68 = vmatpush1.msra.mxu0 %v40
    %69 = vmatprep.subr.mxu0 0.0
    %70 = vmatpush1.msra.mxu0 %v41
    %71 = vmatprep.subr.mxu0 0.0
    %72 = vmatpush1.msra.mxu0 %v42
    %73 = vmatprep.subr.mxu0 0.0
    %74 = vmatpush1.msra.mxu0 %v43
    %75 = vmatprep.subr.mxu0 0.0
    %76 = vmatpush1.msra.mxu0 %v44
    %77 = vmatprep.subr.mxu0 0.0
    %78 = vmatpush1.msra.mxu0 %v45
    %79 = vmatprep.subr.mxu0 0.0
    %80 = vmatpush1.msra.mxu0 %v46
    %81 = vmatprep.subr.mxu0 0.0
    %82 = vmatpush1.msra.mxu0 %v47
    %83 = vmatprep.subr.mxu0 0.0
    %84 = vmatpush1.msra.mxu0 %v48
    %85 = vmatprep.subr.mxu0 0.0
    %86 = vmatpush1.msra.mxu0 0.0
    %87 = vmatprep.subr.mxu0 0.0
    %88 = vmatpush1.msra.mxu0 0.0
    %89 = vmatprep.subr.mxu0 0.0
    %90 = vmatpush1.msra.mxu0 0.0
    %91 = vmatprep.subr.mxu0 0.0
    %92 = vmatpush1.msra.mxu0 0.0
    %93 = vmatprep.subr.mxu0 0.0
    %94 = vmatpush1.msra.mxu0 0.0
    %95 = vmatprep.subr.mxu0 0.0
    %96 = vmatpush1.msra.mxu0 0.0
    %97 = vmatprep.subr.mxu0 0.0
    %98 = vmatpush1.msra.mxu0 0.0
    %99 = vmatprep.subr.mxu0 0.0
    %100 = vmatpush1.msra.mxu0 0.0
    %101 = vmatprep.subr.mxu0 0.0
    %102 = vmatpush1.msra.mxu0 0.0
    %103 = vmatprep.subr.mxu0 0.0
    %104 = vmatpush1.msra.mxu0 0.0
    %105 = vmatprep.subr.mxu0 0.0
    %106 = vmatpush1.msra.mxu0 0.0
    %107 = vmatprep.subr.mxu0 0.0
    %108 = vmatpush1.msra.mxu0 0.0
    %109 = vmatprep.subr.mxu0 0.0
    %110 = vmatpush1.msra.mxu0 0.0
    %111 = vmatprep.subr.mxu0 0.0
    %112 = vmatpush1.msra.mxu0 0.0
    %113 = vmatprep.subr.mxu0 0.0
    %114 = vmatpush1.msra.mxu0 0.0
    %115 = vmatprep.subr.mxu0 0.0
    %116 = vmatpush1.msra.mxu0 0.0
    %117 = vmatprep.mubr.f32.mxu0 0.0
    %118 = vmatmul.mubr.f32.gmra.mrb[0].mxu0 %v28
    %v119 = vpop.f32.mrb[0].mxu0
    %v120 = vadd.f32 %v52, %v119
    %v121 = vpop.f32.mrb[0].mxu0
    %122 = vmatprep.mubr.f32.mxu0 0.0
    %123 = vmatmul.mubr.f32.gmra.mrb[0].mxu0 %v29
    %v124 = vpop.f32.mrb[0].mxu0
    %v125 = vadd.f32 %v52, %v124
    %v126 = vpop.f32.mrb[0].mxu0
    %127 = vdwg.mxu0
    %v128 = vmax.f32 %v120, 0.0
    %v129 = vmax.f32 %v125, 0.0
    %v130 = vadd.f32 %v128, %v129
    %v131 = vrot.slane %v130, 4
    %v132 = vadd.f32 %v130, %v131
    %v133 = vrot.slane %v132, 2
    %v134 = vadd.f32 %v132, %v133
    %v135 = vrot.slane %v134, 1
    %v136 = vadd.f32 %v134, %v135
    %v137 = vrcp.pop 16.0
    %v138 = vmul.f32 %v136, %v137
    %v139 = vsub.f32 %v128, %v138
    %v140 = vsub.f32 %v129, %v138
    %v141 = vmul.f32 %v139, %v139
    %v142 = vmul.f32 %v140, %v140
    %v143 = vadd.f32 %v141, %v142
    %v144 = vrot.slane %v143, 4
    %v145 = vadd.f32 %v143, %v144
    %v146 = vrot.slane %v145, 2
    %v147 = vadd.f32 %v145, %v146
    %v148 = vrot.slane %v147, 1
    %v149 = vadd.f32 %v147, %v148
    %v150 = vmul.f32 %v149, %v137
    %v151 = vadd.f32 %v150, 1e-05
    %v152 = vrsqrt.pop %v151
    %v153 = vmul.f32 %v152, %v31
    %v154 = vlaneseq
    %v155 = vshrl.u32 %v154, 7
    %v156 = vsub.s32 0, %v155
    %v157 = vrot.slane %v153, %v156
    %v158 = vmul.f32 %v139, %v157
    %v159 = vmul.f32 %v140, %v157
    %v160 = vlaneseq
    %v161 = vshrl.u32 %v160, 7
    %v162 = vsub.s32 0, %v161
    %v163 = vrot.slane %v32, %v162
    %v164 = vadd.f32 %v158, %v163
    %v165 = vadd.f32 %v159, %v163
    %v166 = vld [vmem:[%s2 + $0xb] sm:$0x1]
    %v167 = vld [vmem:[%s2 + $0xc] sm:$0x1]
    %v168 = vld [vmem:[%s2 + $0xd] sm:$0x1]
    %s169 = scalar_lea.vmem [#allocation2], 128
    %v170 = vld [vmem:[%s169] sm:$0xff]
    %v171 = vld [vmem:[%s169 + $0x8] sm:$0xff]
    %v172 = vld [vmem:[%s169 + $0x10] sm:$0xff]
    %v173 = vld [vmem:[%s169 + $0x18] sm:$0xff]
    %v174 = vld [vmem:[%s169 + $0x20] sm:$0xff]
    %v175 = vld [vmem:[%s169 + $0x28] sm:$0xff]
    %v176 = vld [vmem:[%s169 + $0x30] sm:$0xff]
    %v177 = vld [vmem:[%s169 + $0x38] sm:$0xff]
    %v178 = vld [vmem:[%s169 + $0x40] sm:$0xff]
    %v179 = vld [vmem:[%s169 + $0x48] sm:$0xff]
    %v180 = vld [vmem:[%s169 + $0x50] sm:$0xff]
    %v181 = vld [vmem:[%s169 + $0x58] sm:$0xff]
    %v182 = vld [vmem:[%s169 + $0x60] sm:$0xff]
    %v183 = vld [vmem:[%s169 + $0x68] sm:$0xff]
    %v184 = vld [vmem:[%s169 + $0x70] sm:$0xff]
    %v185 = vld [vmem:[%s169 + $0x78] sm:$0xff]
    %v186 = vlaneseq
    %v187 = vshrl.u32 %v186, 7
    %v188 = vsub.s32 0, %v187
    %v189 = vrot.slane %v166, %v188
    %190 = vmatprep.subr.mxu0 0.0
    %191 = vmatpush1.msra.mxu0 %v170
    %192 = vmatprep.subr.mxu0 0.0
    %193 = vmatpush1.msra.mxu0 %v171
    %194 = vmatprep.subr.mxu0 0.0
    %195 = vmatpush1.msra.mxu0 %v172
    %196 = vmatprep.subr.mxu0 0.0
    %197 = vmatpush1.msra.mxu0 %v173
    %198 = vmatprep.subr.mxu0 0.0
    %199 = vmatpush1.msra.mxu0 %v174
    %200 = vmatprep.subr.mxu0 0.0
    %201 = vmatpush1.msra.mxu0 %v175
    %202 = vmatprep.subr.mxu0 0.0
    %203 = vmatpush1.msra.mxu0 %v176
    %204 = vmatprep.subr.mxu0 0.0
    %205 = vmatpush1.msra.mxu0 %v177
    %206 = vmatprep.subr.mxu0 0.0
    %207 = vmatpush1.msra.mxu0 %v178
    %208 = vmatprep.subr.mxu0 0.0
    %209 = vmatpush1.msra.mxu0 %v179
    %210 = vmatprep.subr.mxu0 0.0
    %211 = vmatpush1.msra.mxu0 %v180
    %212 = vmatprep.subr.mxu0 0.0
    %213 = vmatpush1.msra.mxu0 %v181
    %214 = vmatprep.subr.mxu0 0.0
    %215 = vmatpush1.msra.mxu0 %v182
    %216 = vmatprep.subr.mxu0 0.0
    %217 = vmatpush1.msra.mxu0 %v183
    %218 = vmatprep.subr.mxu0 0.0
    %219 = vmatpush1.msra.mxu0 %v184
    %220 = vmatprep.subr.mxu0 0.0
    %221 = vmatpush1.msra.mxu0 %v185
    %222 = vmatprep.subr.mxu0 0.0
    %223 = vmatpush1.msra.mxu0 0.0
    %224 = vmatprep.subr.mxu0 0.0
    %225 = vmatpush1.msra.mxu0 0.0
    %226 = vmatprep.subr.mxu0 0.0
    %227 = vmatpush1.msra.mxu0 0.0
    %228 = vmatprep.subr.mxu0 0.0
    %229 = vmatpush1.msra.mxu0 0.0
    %230 = vmatprep.subr.mxu0 0.0
    %231 = vmatpush1.msra.mxu0 0.0
    %232 = vmatprep.subr.mxu0 0.0
    %233 = vmatpush1.msra.mxu0 0.0
    %234 = vmatprep.subr.mxu0 0.0
    %235 = vmatpush1.msra.mxu0 0.0
    %236 = vmatprep.subr.mxu0 0.0
    %237 = vmatpush1.msra.mxu0 0.0
    %238 = vmatprep.subr.mxu0 0.0
    %239 = vmatpush1.msra.mxu0 0.0
    %240 = vmatprep.subr.mxu0 0.0
    %241 = vmatpush1.msra.mxu0 0.0
    %242 = vmatprep.subr.mxu0 0.0
    %243 = vmatpush1.msra.mxu0 0.0
    %244 = vmatprep.subr.mxu0 0.0
    %245 = vmatpush1.msra.mxu0 0.0
    %246 = vmatprep.subr.mxu0 0.0
    %247 = vmatpush1.msra.mxu0 0.0
    %248 = vmatprep.subr.mxu0 0.0
    %249 = vmatpush1.msra.mxu0 0.0
    %250 = vmatprep.subr.mxu0 0.0
    %251 = vmatpush1.msra.mxu0 0.0
    %252 = vmatprep.subr.mxu0 0.0
    %253 = vmatpush1.msra.mxu0 0.0
    %254 = vmatprep.mubr.f32.mxu0 0.0
    %255 = vmatmul.mubr.f32.gmra.mrb[0].mxu0 %v164
    %v256 = vpop.f32.mrb[0].mxu0
    %v257 = vadd.f32 %v189, %v256
    %v258 = vpop.f32.mrb[0].mxu0
    %259 = vmatprep.mubr.f32.mxu0 0.0
    %260 = vmatmul.mubr.f32.gmra.mrb[0].mxu0 %v165
    %v261 = vpop.f32.mrb[0].mxu0
    %v262 = vadd.f32 %v189, %v261
    %v263 = vpop.f32.mrb[0].mxu0
    %264 = vdwg.mxu0
    %v265 = vmax.f32 %v257, 0.0
    %v266 = vmax.f32 %v262, 0.0
    %v267 = vadd.f32 %v265, %v266
    %v268 = vrot.slane %v267, 4
    %v269 = vadd.f32 %v267, %v268
    %v270 = vrot.slane %v269, 2
    %v271 = vadd.f32 %v269, %v270
    %v272 = vrot.slane %v271, 1
    %v273 = vadd.f32 %v271, %v272
    %v274 = vmul.f32 %v273, %v137
    %v275 = vsub.f32 %v265, %v274
    %v276 = vsub.f32 %v266, %v274
    %v277 = vmul.f32 %v275, %v275
    %v278 = vmul.f32 %v276, %v276
    %v279 = vadd.f32 %v277, %v278
    %v280 = vrot.slane %v279, 4
    %v281 = vadd.f32 %v279, %v280
    %v282 = vrot.slane %v281, 2
    %v283 = vadd.f32 %v281, %v282
    %v284 = vrot.slane %v283, 1
    %v285 = vadd.f32 %v283, %v284
    %v286 = vmul.f32 %v285, %v137
    %v287 = vadd.f32 %v286, 1e-05
    %v288 = vrsqrt.pop %v287
    %v289 = vmul.f32 %v288, %v167
    %v290 = vlaneseq
    %v291 = vshrl.u32 %v290, 7
    %v292 = vsub.s32 0, %v291
    %v293 = vrot.slane %v289, %v292
    %v294 = vmul.f32 %v275, %v293
    %v295 = vmul.f32 %v276, %v293
    %v296 = vlaneseq
    %v297 = vshrl.u32 %v296, 7
    %v298 = vsub.s32 0, %v297
    %v299 = vrot.slane %v168, %v298
    %v300 = vadd.f32 %v294, %v299
    %v301 = vadd.f32 %v295, %v299
    %v302 = vld [vmem:[%s2 + $0xe] sm:$0x1]
    %v303 = vld [vmem:[%s2 + $0xf] sm:$0x1]
    %v304 = vld [vmem:[%s2 + $0x10] sm:$0x1]
    %s305 = scalar_lea.vmem [#allocation2], 256
    %v306 = vld [vmem:[%s305] sm:$0xff]
    %v307 = vld [vmem:[%s305 + $0x8] sm:$0xff]
    %v308 = vld [vmem:[%s305 + $0x10] sm:$0xff]
    %v309 = vld [vmem:[%s305 + $0x18] sm:$0xff]
    %v310 = vld [vmem:[%s305 + $0x20] sm:$0xff]
    %v311 = vld [vmem:[%s305 + $0x28] sm:$0xff]
    %v312 = vld [vmem:[%s305 + $0x30] sm:$0xff]
    %v313 = vld [vmem:[%s305 + $0x38] sm:$0xff]
    %v314 = vld [vmem:[%s305 + $0x40] sm:$0xff]
    %v315 = vld [vmem:[%s305 + $0x48] sm:$0xff]
    %v316 = vld [vmem:[%s305 + $0x50] sm:$0xff]
    %v317 = vld [vmem:[%s305 + $0x58] sm:$0xff]
    %v318 = vld [vmem:[%s305 + $0x60] sm:$0xff]
    %v319 = vld [vmem:[%s305 + $0x68] sm:$0xff]
    %v320 = vld [vmem:[%s305 + $0x70] sm:$0xff]
    %v321 = vld [vmem:[%s305 + $0x78] sm:$0xff]
    %v322 = vlaneseq
    %v323 = vshrl.u32 %v322, 7
    %v324 = vsub.s32 0, %v323
    %v325 = vrot.slane %v302, %v324
    %326 = vmatprep.subr.mxu0 0.0
    %327 = vmatpush1.msra.mxu0 %v306
    %328 = vmatprep.subr.mxu0 0.0
    %329 = vmatpush1.msra.mxu0 %v307
    %330 = vmatprep.subr.mxu0 0.0
    %331 = vmatpush1.msra.mxu0 %v308
    %332 = vmatprep.subr.mxu0 0.0
    %333 = vmatpush1.msra.mxu0 %v309
    %334 = vmatprep.subr.mxu0 0.0
    %335 = vmatpush1.msra.mxu0 %v310
    %336 = vmatprep.subr.mxu0 0.0
    %337 = vmatpush1.msra.mxu0 %v311
    %338 = vmatprep.subr.mxu0 0.0
    %339 = vmatpush1.msra.mxu0 %v312
    %340 = vmatprep.subr.mxu0 0.0
    %341 = vmatpush1.msra.mxu0 %v313
    %342 = vmatprep.subr.mxu0 0.0
    %343 = vmatpush1.msra.mxu0 %v314
    %344 = vmatprep.subr.mxu0 0.0
    %345 = vmatpush1.msra.mxu0 %v315
    %346 = vmatprep.subr.mxu0 0.0
    %347 = vmatpush1.msra.mxu0 %v316
    %348 = vmatprep.subr.mxu0 0.0
    %349 = vmatpush1.msra.mxu0 %v317
    %350 = vmatprep.subr.mxu0 0.0
    %351 = vmatpush1.msra.mxu0 %v318
    %352 = vmatprep.subr.mxu0 0.0
    %353 = vmatpush1.msra.mxu0 %v319
    %354 = vmatprep.subr.mxu0 0.0
    %355 = vmatpush1.msra.mxu0 %v320
    %356 = vmatprep.subr.mxu0 0.0
    %357 = vmatpush1.msra.mxu0 %v321
    %358 = vmatprep.subr.mxu0 0.0
    %359 = vmatpush1.msra.mxu0 0.0
    %360 = vmatprep.subr.mxu0 0.0
    %361 = vmatpush1.msra.mxu0 0.0
    %362 = vmatprep.subr.mxu0 0.0
    %363 = vmatpush1.msra.mxu0 0.0
    %364 = vmatprep.subr.mxu0 0.0
    %365 = vmatpush1.msra.mxu0 0.0
    %366 = vmatprep.subr.mxu0 0.0
    %367 = vmatpush1.msra.mxu0 0.0
    %368 = vmatprep.subr.mxu0 0.0
    %369 = vmatpush1.msra.mxu0 0.0
    %370 = vmatprep.subr.mxu0 0.0
    %371 = vmatpush1.msra.mxu0 0.0
    %372 = vmatprep.subr.mxu0 0.0
    %373 = vmatpush1.msra.mxu0 0.0
    %374 = vmatprep.subr.mxu0 0.0
    %375 = vmatpush1.msra.mxu0 0.0
    %376 = vmatprep.subr.mxu0 0.0
    %377 = vmatpush1.msra.mxu0 0.0
    %378 = vmatprep.subr.mxu0 0.0
    %379 = vmatpush1.msra.mxu0 0.0
    %380 = vmatprep.subr.mxu0 0.0
    %381 = vmatpush1.msra.mxu0 0.0
    %382 = vmatprep.subr.mxu0 0.0
    %383 = vmatpush1.msra.mxu0 0.0
    %384 = vmatprep.subr.mxu0 0.0
    %385 = vmatpush1.msra.mxu0 0.0
    %386 = vmatprep.subr.mxu0 0.0
    %387 = vmatpush1.msra.mxu0 0.0
    %388 = vmatprep.subr.mxu0 0.0
    %389 = vmatpush1.msra.mxu0 0.0
    %390 = vmatprep.mubr.f32.mxu0 0.0
    %391 = vmatmul.mubr.f32.gmra.mrb[0].mxu0 %v300
    %v392 = vpop.f32.mrb[0].mxu0
    %v393 = vadd.f32 %v325, %v392
    %v394 = vpop.f32.mrb[0].mxu0
    %395 = vmatprep.mubr.f32.mxu0 0.0
    %396 = vmatmul.mubr.f32.gmra.mrb[0].mxu0 %v301
    %v397 = vpop.f32.mrb[0].mxu0
    %v398 = vadd.f32 %v325, %v397
    %v399 = vpop.f32.mrb[0].mxu0
    %400 = vdwg.mxu0
    %v401 = vmax.f32 %v393, 0.0
    %v402 = vmax.f32 %v398, 0.0
    %v403 = vadd.f32 %v401, %v402
    %v404 = vrot.slane %v403, 4
    %v405 = vadd.f32 %v403, %v404
    %v406 = vrot.slane %v405, 2
    %v407 = vadd.f32 %v405, %v406
    %v408 = vrot.slane %v407, 1
    %v409 = vadd.f32 %v407, %v408
    %v410 = vmul.f32 %v409, %v137
    %v411 = vsub.f32 %v401, %v410
    %v412 = vsub.f32 %v402, %v410
    %v413 = vmul.f32 %v411, %v411
    %v414 = vmul.f32 %v412, %v412
    %v415 = vadd.f32 %v413, %v414
    %v416 = vrot.slane %v415, 4
    %v417 = vadd.f32 %v415, %v416
    %v418 = vrot.slane %v417, 2
    %v419 = vadd.f32 %v417, %v418
    %v420 = vrot.slane %v419, 1
    %v421 = vadd.f32 %v419, %v420
    %v422 = vmul.f32 %v421, %v137
    %v423 = vadd.f32 %v422, 1e-05
    %v424 = vrsqrt.pop %v423
    %v425 = vmul.f32 %v424, %v303
    %v426 = vlaneseq
    %v427 = vshrl.u32 %v426, 7
    %v428 = vsub.s32 0, %v427
    %v429 = vrot.slane %v425, %v428
    %v430 = vmul.f32 %v411, %v429
    %v431 = vmul.f32 %v412, %v429
    %v432 = vlaneseq
    %v433 = vshrl.u32 %v432, 7
    %v434 = vsub.s32 0, %v433
    %v435 = vrot.slane %v304, %v434
    %v436 = vadd.f32 %v430, %v435
    %v437 = vadd.f32 %v431, %v435
    %v438 = vld [vmem:[%s2 + $0x11] sm:$0x1]
    %v439 = vld [vmem:[%s2 + $0x12] sm:$0x1]
    %v440 = vld [vmem:[%s2 + $0x13] sm:$0x1]
    %s441 = scalar_lea.vmem [#allocation2], 384
    %v442 = vld [vmem:[%s441] sm:$0xff]
    %v443 = vld [vmem:[%s441 + $0x8] sm:$0xff]
    %v444 = vld [vmem:[%s441 + $0x10] sm:$0xff]
    %v445 = vld [vmem:[%s441 + $0x18] sm:$0xff]
    %v446 = vld [vmem:[%s441 + $0x20] sm:$0xff]
    %v447 = vld [vmem:[%s441 + $0x28] sm:$0xff]
    %v448 = vld [vmem:[%s441 + $0x30] sm:$0xff]
    %v449 = vld [vmem:[%s441 + $0x38] sm:$0xff]
    %v450 = vld [vmem:[%s441 + $0x40] sm:$0xff]
    %v451 = vld [vmem:[%s441 + $0x48] sm:$0xff]
    %v452 = vld [vmem:[%s441 + $0x50] sm:$0xff]
    %v453 = vld [vmem:[%s441 + $0x58] sm:$0xff]
    %v454 = vld [vmem:[%s441 + $0x60] sm:$0xff]
    %v455 = vld [vmem:[%s441 + $0x68] sm:$0xff]
    %v456 = vld [vmem:[%s441 + $0x70] sm:$0xff]
    %v457 = vld [vmem:[%s441 + $0x78] sm:$0xff]
    %v458 = vlaneseq
    %v459 = vshrl.u32 %v458, 7
    %v460 = vsub.s32 0, %v459
    %v461 = vrot.slane %v438, %v460
    %462 = vmatprep.subr.mxu0 0.0
    %463 = vmatpush1.msra.mxu0 %v442
    %464 = vmatprep.subr.mxu0 0.0
    %465 = vmatpush1.msra.mxu0 %v443
    %466 = vmatprep.subr.mxu0 0.0
    %467 = vmatpush1.msra.mxu0 %v444
    %468 = vmatprep.subr.mxu0 0.0
    %469 = vmatpush1.msra.mxu0 %v445
    %470 = vmatprep.subr.mxu0 0.0
    %471 = vmatpush1.msra.mxu0 %v446
    %472 = vmatprep.subr.mxu0 0.0
    %473 = vmatpush1.msra.mxu0 %v447
    %474 = vmatprep.subr.mxu0 0.0
    %475 = vmatpush1.msra.mxu0 %v448
    %476 = vmatprep.subr.mxu0 0.0
    %477 = vmatpush1.msra.mxu0 %v449
    %478 = vmatprep.subr.mxu0 0.0
    %479 = vmatpush1.msra.mxu0 %v450
    %480 = vmatprep.subr.mxu0 0.0
    %481 = vmatpush1.msra.mxu0 %v451
    %482 = vmatprep.subr.mxu0 0.0
    %483 = vmatpush1.msra.mxu0 %v452
    %484 = vmatprep.subr.mxu0 0.0
    %485 = vmatpush1.msra.mxu0 %v453
    %486 = vmatprep.subr.mxu0 0.0
    %487 = vmatpush1.msra.mxu0 %v454
    %488 = vmatprep.subr.mxu0 0.0
    %489 = vmatpush1.msra.mxu0 %v455
    %490 = vmatprep.subr.mxu0 0.0
    %491 = vmatpush1.msra.mxu0 %v456
    %492 = vmatprep.subr.mxu0 0.0
    %493 = vmatpush1.msra.mxu0 %v457
    %494 = vmatprep.subr.mxu0 0.0
    %495 = vmatpush1.msra.mxu0 0.0
    %496 = vmatprep.subr.mxu0 0.0
    %497 = vmatpush1.msra.mxu0 0.0
    %498 = vmatprep.subr.mxu0 0.0
    %499 = vmatpush1.msra.mxu0 0.0
    %500 = vmatprep.subr.mxu0 0.0
    %501 = vmatpush1.msra.mxu0 0.0
    %502 = vmatprep.subr.mxu0 0.0
    %503 = vmatpush1.msra.mxu0 0.0
    %504 = vmatprep.subr.mxu0 0.0
    %505 = vmatpush1.msra.mxu0 0.0
    %506 = vmatprep.subr.mxu0 0.0
    %507 = vmatpush1.msra.mxu0 0.0
    %508 = vmatprep.subr.mxu0 0.0
    %509 = vmatpush1.msra.mxu0 0.0
    %510 = vmatprep.subr.mxu0 0.0
    %511 = vmatpush1.msra.mxu0 0.0
    %512 = vmatprep.subr.mxu0 0.0
    %513 = vmatpush1.msra.mxu0 0.0
    %514 = vmatprep.subr.mxu0 0.0
    %515 = vmatpush1.msra.mxu0 0.0
    %516 = vmatprep.subr.mxu0 0.0
    %517 = vmatpush1.msra.mxu0 0.0
    %518 = vmatprep.subr.mxu0 0.0
    %519 = vmatpush1.msra.mxu0 0.0
    %520 = vmatprep.subr.mxu0 0.0
    %521 = vmatpush1.msra.mxu0 0.0
    %522 = vmatprep.subr.mxu0 0.0
    %523 = vmatpush1.msra.mxu0 0.0
    %524 = vmatprep.subr.mxu0 0.0
    %525 = vmatpush1.msra.mxu0 0.0
    %526 = vmatprep.mubr.f32.mxu0 0.0
    %527 = vmatmul.mubr.f32.gmra.mrb[0].mxu0 %v436
    %v528 = vpop.f32.mrb[0].mxu0
    %v529 = vadd.f32 %v461, %v528
    %v530 = vpop.f32.mrb[0].mxu0
    %531 = vmatprep.mubr.f32.mxu0 0.0
    %532 = vmatmul.mubr.f32.gmra.mrb[0].mxu0 %v437
    %v533 = vpop.f32.mrb[0].mxu0
    %v534 = vadd.f32 %v461, %v533
    %v535 = vpop.f32.mrb[0].mxu0
    %536 = vdwg.mxu0
    %v537 = vmax.f32 %v529, 0.0
    %v538 = vmax.f32 %v534, 0.0
    %v539 = vadd.f32 %v537, %v538
    %v540 = vrot.slane %v539, 4
    %v541 = vadd.f32 %v539, %v540
    %v542 = vrot.slane %v541, 2
    %v543 = vadd.f32 %v541, %v542
    %v544 = vrot.slane %v543, 1
    %v545 = vadd.f32 %v543, %v544
    %v546 = vmul.f32 %v545, %v137
    %v547 = vsub.f32 %v537, %v546
    %v548 = vsub.f32 %v538, %v546
    %v549 = vmul.f32 %v547, %v547
    %v550 = vmul.f32 %v548, %v548
    %v551 = vadd.f32 %v549, %v550
    %v552 = vrot.slane %v551, 4
    %v553 = vadd.f32 %v551, %v552
    %v554 = vrot.slane %v553, 2
    %v555 = vadd.f32 %v553, %v554
    %v556 = vrot.slane %v555, 1
    %v557 = vadd.f32 %v555, %v556
    %v558 = vmul.f32 %v557, %v137
    %v559 = vadd.f32 %v558, 1e-05
    %v560 = vrsqrt.pop %v559
    %v561 = vmul.f32 %v560, %v439
    %v562 = vlaneseq
    %v563 = vshrl.u32 %v562, 7
    %v564 = vsub.s32 0, %v563
    %v565 = vrot.slane %v561, %v564
    %v566 = vmul.f32 %v547, %v565
    %v567 = vmul.f32 %v548, %v565
    %v568 = vlaneseq
    %v569 = vshrl.u32 %v568, 7
    %v570 = vsub.s32 0, %v569
    %v571 = vrot.slane %v440, %v570
    %v572 = vadd.f32 %v566, %v571
    %v573 = vadd.f32 %v567, %v571
    %v574 = vld [vmem:[%s2 + $0x14] sm:$0x1]
    %v575 = vld [vmem:[%s2 + $0x15] sm:$0x1]
    %v576 = vld [vmem:[%s2 + $0x16] sm:$0x1]
    %s577 = scalar_lea.vmem [#allocation2], 512
    %v578 = vld [vmem:[%s577] sm:$0xff]
    %v579 = vld [vmem:[%s577 + $0x8] sm:$0xff]
    %v580 = vld [vmem:[%s577 + $0x10] sm:$0xff]
    %v581 = vld [vmem:[%s577 + $0x18] sm:$0xff]
    %v582 = vld [vmem:[%s577 + $0x20] sm:$0xff]
    %v583 = vld [vmem:[%s577 + $0x28] sm:$0xff]
    %v584 = vld [vmem:[%s577 + $0x30] sm:$0xff]
    %v585 = vld [vmem:[%s577 + $0x38] sm:$0xff]
    %v586 = vld [vmem:[%s577 + $0x40] sm:$0xff]
    %v587 = vld [vmem:[%s577 + $0x48] sm:$0xff]
    %v588 = vld [vmem:[%s577 + $0x50] sm:$0xff]
    %v589 = vld [vmem:[%s577 + $0x58] sm:$0xff]
    %v590 = vld [vmem:[%s577 + $0x60] sm:$0xff]
    %v591 = vld [vmem:[%s577 + $0x68] sm:$0xff]
    %v592 = vld [vmem:[%s577 + $0x70] sm:$0xff]
    %v593 = vld [vmem:[%s577 + $0x78] sm:$0xff]
    %v594 = vlaneseq
    %v595 = vshrl.u32 %v594, 7
    %v596 = vsub.s32 0, %v595
    %v597 = vrot.slane %v574, %v596
    %598 = vmatprep.subr.mxu0 0.0
    %599 = vmatpush1.msra.mxu0 %v578
    %600 = vmatprep.subr.mxu0 0.0
    %601 = vmatpush1.msra.mxu0 %v579
    %602 = vmatprep.subr.mxu0 0.0
    %603 = vmatpush1.msra.mxu0 %v580
    %604 = vmatprep.subr.mxu0 0.0
    %605 = vmatpush1.msra.mxu0 %v581
    %606 = vmatprep.subr.mxu0 0.0
    %607 = vmatpush1.msra.mxu0 %v582
    %608 = vmatprep.subr.mxu0 0.0
    %609 = vmatpush1.msra.mxu0 %v583
    %610 = vmatprep.subr.mxu0 0.0
    %611 = vmatpush1.msra.mxu0 %v584
    %612 = vmatprep.subr.mxu0 0.0
    %613 = vmatpush1.msra.mxu0 %v585
    %614 = vmatprep.subr.mxu0 0.0
    %615 = vmatpush1.msra.mxu0 %v586
    %616 = vmatprep.subr.mxu0 0.0
    %617 = vmatpush1.msra.mxu0 %v587
    %618 = vmatprep.subr.mxu0 0.0
    %619 = vmatpush1.msra.mxu0 %v588
    %620 = vmatprep.subr.mxu0 0.0
    %621 = vmatpush1.msra.mxu0 %v589
    %622 = vmatprep.subr.mxu0 0.0
    %623 = vmatpush1.msra.mxu0 %v590
    %624 = vmatprep.subr.mxu0 0.0
    %625 = vmatpush1.msra.mxu0 %v591
    %626 = vmatprep.subr.mxu0 0.0
    %627 = vmatpush1.msra.mxu0 %v592
    %628 = vmatprep.subr.mxu0 0.0
    %629 = vmatpush1.msra.mxu0 %v593
    %630 = vmatprep.subr.mxu0 0.0
    %631 = vmatpush1.msra.mxu0 0.0
    %632 = vmatprep.subr.mxu0 0.0
    %633 = vmatpush1.msra.mxu0 0.0
    %634 = vmatprep.subr.mxu0 0.0
    %635 = vmatpush1.msra.mxu0 0.0
    %636 = vmatprep.subr.mxu0 0.0
    %637 = vmatpush1.msra.mxu0 0.0
    %638 = vmatprep.subr.mxu0 0.0
    %639 = vmatpush1.msra.mxu0 0.0
    %640 = vmatprep.subr.mxu0 0.0
    %641 = vmatpush1.msra.mxu0 0.0
    %642 = vmatprep.subr.mxu0 0.0
    %643 = vmatpush1.msra.mxu0 0.0
    %644 = vmatprep.subr.mxu0 0.0
    %645 = vmatpush1.msra.mxu0 0.0
    %646 = vmatprep.subr.mxu0 0.0
    %647 = vmatpush1.msra.mxu0 0.0
    %648 = vmatprep.subr.mxu0 0.0
    %649 = vmatpush1.msra.mxu0 0.0
    %650 = vmatprep.subr.mxu0 0.0
    %651 = vmatpush1.msra.mxu0 0.0
    %652 = vmatprep.subr.mxu0 0.0
    %653 = vmatpush1.msra.mxu0 0.0
    %654 = vmatprep.subr.mxu0 0.0
    %655 = vmatpush1.msra.mxu0 0.0
    %656 = vmatprep.subr.mxu0 0.0
    %657 = vmatpush1.msra.mxu0 0.0
    %658 = vmatprep.subr.mxu0 0.0
    %659 = vmatpush1.msra.mxu0 0.0
    %660 = vmatprep.subr.mxu0 0.0
    %661 = vmatpush1.msra.mxu0 0.0
    %662 = vmatprep.mubr.f32.mxu0 0.0
    %663 = vmatmul.mubr.f32.gmra.mrb[0].mxu0 %v572
    %v664 = vpop.f32.mrb[0].mxu0
    %v665 = vadd.f32 %v597, %v664
    %v666 = vpop.f32.mrb[0].mxu0
    %667 = vmatprep.mubr.f32.mxu0 0.0
    %668 = vmatmul.mubr.f32.gmra.mrb[0].mxu0 %v573
    %v669 = vpop.f32.mrb[0].mxu0
    %v670 = vadd.f32 %v597, %v669
    %v671 = vpop.f32.mrb[0].mxu0
    %672 = vdwg.mxu0
    %v673 = vmax.f32 %v665, 0.0
    %v674 = vmax.f32 %v670, 0.0
    %v675 = vadd.f32 %v673, %v674
    %v676 = vrot.slane %v675, 4
    %v677 = vadd.f32 %v675, %v676
    %v678 = vrot.slane %v677, 2
    %v679 = vadd.f32 %v677, %v678
    %v680 = vrot.slane %v679, 1
    %v681 = vadd.f32 %v679, %v680
    %v682 = vmul.f32 %v681, %v137
    %v683 = vsub.f32 %v673, %v682
    %v684 = vsub.f32 %v674, %v682
    %v685 = vmul.f32 %v683, %v683
    %v686 = vmul.f32 %v684, %v684
    %v687 = vadd.f32 %v685, %v686
    %v688 = vrot.slane %v687, 4
    %v689 = vadd.f32 %v687, %v688
    %v690 = vrot.slane %v689, 2
    %v691 = vadd.f32 %v689, %v690
    %v692 = vrot.slane %v691, 1
    %v693 = vadd.f32 %v691, %v692
    %v694 = vmul.f32 %v693, %v137
    %v695 = vadd.f32 %v694, 1e-05
    %v696 = vrsqrt.pop %v695
    %v697 = vmul.f32 %v696, %v575
    %v698 = vlaneseq
    %v699 = vshrl.u32 %v698, 7
    %v700 = vsub.s32 0, %v699
    %v701 = vrot.slane %v697, %v700
    %v702 = vmul.f32 %v683, %v701
    %v703 = vmul.f32 %v684, %v701
    %v704 = vlaneseq
    %v705 = vshrl.u32 %v704, 7
    %v706 = vsub.s32 0, %v705
    %v707 = vrot.slane %v576, %v706
    %v708 = vadd.f32 %v702, %v707
    %v709 = vadd.f32 %v703, %v707
    %v710 = vld [vmem:[%s2] sm:$0xff]
    %s711 = scalar_lea.vmem [#allocation2], 640
    %v712 = vld [vmem:[%s711] sm:$0xff]
    %v713 = vld [vmem:[%s711 + $0x8] sm:$0xff]
    %v714 = vld [vmem:[%s711 + $0x10] sm:$0xff]
    %v715 = vld [vmem:[%s711 + $0x18] sm:$0xff]
    %v716 = vld [vmem:[%s711 + $0x20] sm:$0xff]
    %v717 = vld [vmem:[%s711 + $0x28] sm:$0xff]
    %v718 = vld [vmem:[%s711 + $0x30] sm:$0xff]
    %v719 = vld [vmem:[%s711 + $0x38] sm:$0xff]
    %v720 = vld [vmem:[%s711 + $0x40] sm:$0xff]
    %v721 = vld [vmem:[%s711 + $0x48] sm:$0xff]
    %v722 = vld [vmem:[%s711 + $0x50] sm:$0xff]
    %v723 = vld [vmem:[%s711 + $0x58] sm:$0xff]
    %v724 = vld [vmem:[%s711 + $0x60] sm:$0xff]
    %v725 = vld [vmem:[%s711 + $0x68] sm:$0xff]
    %v726 = vld [vmem:[%s711 + $0x70] sm:$0xff]
    %v727 = vld [vmem:[%s711 + $0x78] sm:$0xff]
    %728 = vmatprep.subr.mxu0 0.0
    %729 = vmatpush1.msra.mxu0 %v712
    %730 = vmatprep.subr.mxu0 0.0
    %731 = vmatpush1.msra.mxu0 %v713
    %732 = vmatprep.subr.mxu0 0.0
    %733 = vmatpush1.msra.mxu0 %v714
    %734 = vmatprep.subr.mxu0 0.0
    %735 = vmatpush1.msra.mxu0 %v715
    %736 = vmatprep.subr.mxu0 0.0
    %737 = vmatpush1.msra.mxu0 %v716
    %738 = vmatprep.subr.mxu0 0.0
    %739 = vmatpush1.msra.mxu0 %v717
    %740 = vmatprep.subr.mxu0 0.0
    %741 = vmatpush1.msra.mxu0 %v718
    %742 = vmatprep.subr.mxu0 0.0
    %743 = vmatpush1.msra.mxu0 %v719
    %744 = vmatprep.subr.mxu0 0.0
    %745 = vmatpush1.msra.mxu0 %v720
    %746 = vmatprep.subr.mxu0 0.0
    %747 = vmatpush1.msra.mxu0 %v721
    %748 = vmatprep.subr.mxu0 0.0
    %749 = vmatpush1.msra.mxu0 %v722
    %750 = vmatprep.subr.mxu0 0.0
    %751 = vmatpush1.msra.mxu0 %v723
    %752 = vmatprep.subr.mxu0 0.0
    %753 = vmatpush1.msra.mxu0 %v724
    %754 = vmatprep.subr.mxu0 0.0
    %755 = vmatpush1.msra.mxu0 %v725
    %756 = vmatprep.subr.mxu0 0.0
    %757 = vmatpush1.msra.mxu0 %v726
    %758 = vmatprep.subr.mxu0 0.0
    %759 = vmatpush1.msra.mxu0 %v727
    %760 = vmatprep.subr.mxu0 0.0
    %761 = vmatpush1.msra.mxu0 0.0
    %762 = vmatprep.subr.mxu0 0.0
    %763 = vmatpush1.msra.mxu0 0.0
    %764 = vmatprep.subr.mxu0 0.0
    %765 = vmatpush1.msra.mxu0 0.0
    %766 = vmatprep.subr.mxu0 0.0
    %767 = vmatpush1.msra.mxu0 0.0
    %768 = vmatprep.subr.mxu0 0.0
    %769 = vmatpush1.msra.mxu0 0.0
    %770 = vmatprep.subr.mxu0 0.0
    %771 = vmatpush1.msra.mxu0 0.0
    %772 = vmatprep.subr.mxu0 0.0
    %773 = vmatpush1.msra.mxu0 0.0
    %774 = vmatprep.subr.mxu0 0.0
    %775 = vmatpush1.msra.mxu0 0.0
    %776 = vmatprep.subr.mxu0 0.0
    %777 = vmatpush1.msra.mxu0 0.0
    %778 = vmatprep.subr.mxu0 0.0
    %779 = vmatpush1.msra.mxu0 0.0
    %780 = vmatprep.subr.mxu0 0.0
    %781 = vmatpush1.msra.mxu0 0.0
    %782 = vmatprep.subr.mxu0 0.0
    %783 = vmatpush1.msra.mxu0 0.0
    %784 = vmatprep.subr.mxu0 0.0
    %785 = vmatpush1.msra.mxu0 0.0
    %786 = vmatprep.subr.mxu0 0.0
    %787 = vmatpush1.msra.mxu0 0.0
    %788 = vmatprep.subr.mxu0 0.0
    %789 = vmatpush1.msra.mxu0 0.0
    %790 = vmatprep.subr.mxu0 0.0
    %791 = vmatpush1.msra.mxu0 0.0
    %792 = vmatprep.mubr.f32.mxu0 0.0
    %793 = vmatmul.mubr.f32.gmra.mrb[0].mxu0 %v708
    %v794 = vpop.f32.mrb[0].mxu0
    %v795 = vadd.f32 %v710, %v794
    %v796 = vpop.f32.mrb[0].mxu0
    %797 = vmatprep.mubr.f32.mxu0 0.0
    %798 = vmatmul.mubr.f32.gmra.mrb[0].mxu0 %v709
    %v799 = vpop.f32.mrb[0].mxu0
    %v800 = vadd.f32 %v710, %v799
    %v801 = vpop.f32.mrb[0].mxu0
    %802 = vdwg.mxu0
    %v803 = vmax.f32 %v795, 0.0
    %v804 = vmax.f32 %v800, 0.0
    %v805 = vld [vmem:[%s2 + $0x17] sm:$0x1]
    %v806 = vld [vmem:[%s2 + $0x18] sm:$0x1]
    %v807 = vadd.f32 %v803, %v804
    %v808 = vrot.slane %v807, 4
    %v809 = vadd.f32 %v807, %v808
    %v810 = vrot.slane %v809, 2
    %v811 = vadd.f32 %v809, %v810
    %v812 = vrot.slane %v811, 1
    %v813 = vadd.f32 %v811, %v812
    %v814 = vmul.f32 %v813, %v137
    %v815 = vsub.f32 %v803, %v814
    %v816 = vsub.f32 %v804, %v814
    %v817 = vmul.f32 %v815, %v815
    %v818 = vmul.f32 %v816, %v816
    %v819 = vadd.f32 %v817, %v818
    %v820 = vrot.slane %v819, 4
    %v821 = vadd.f32 %v819, %v820
    %v822 = vrot.slane %v821, 2
    %v823 = vadd.f32 %v821, %v822
    %v824 = vrot.slane %v823, 1
    %v825 = vadd.f32 %v823, %v824
    %v826 = vmul.f32 %v825, %v137
    %v827 = vadd.f32 %v826, 1e-05
    %v828 = vrsqrt.pop %v827
    %v829 = vmul.f32 %v828, %v805
    %v830 = vlaneseq
    %v831 = vshrl.u32 %v830, 7
    %v832 = vsub.s32 0, %v831
    %v833 = vrot.slane %v829, %v832
    %v834 = vmul.f32 %v815, %v833
    %v835 = vmul.f32 %v816, %v833
    %v836 = vlaneseq
    %v837 = vshrl.u32 %v836, 7
    %v838 = vsub.s32 0, %v837
    %v839 = vrot.slane %v806, %v838
    %v840 = vadd.f32 %v834, %v839
    %v841 = vadd.f32 %v835, %v839
    %v842 = vld [vmem:[%s2 + $0x19] sm:$0x1]
    %v843 = vld [vmem:[%s2 + $0x1a] sm:$0x1]
    %v844 = vld [vmem:[%s2 + $0x1b] sm:$0x1]
    %s845 = scalar_lea.vmem [#allocation2], 768
    %v846 = vld [vmem:[%s845] sm:$0xff]
    %v847 = vld [vmem:[%s845 + $0x8] sm:$0xff]
    %v848 = vld [vmem:[%s845 + $0x10] sm:$0xff]
    %v849 = vld [vmem:[%s845 + $0x18] sm:$0xff]
    %v850 = vld [vmem:[%s845 + $0x20] sm:$0xff]
    %v851 = vld [vmem:[%s845 + $0x28] sm:$0xff]
    %v852 = vld [vmem:[%s845 + $0x30] sm:$0xff]
    %v853 = vld [vmem:[%s845 + $0x38] sm:$0xff]
    %v854 = vld [vmem:[%s845 + $0x40] sm:$0xff]
    %v855 = vld [vmem:[%s845 + $0x48] sm:$0xff]
    %v856 = vld [vmem:[%s845 + $0x50] sm:$0xff]
    %v857 = vld [vmem:[%s845 + $0x58] sm:$0xff]
    %v858 = vld [vmem:[%s845 + $0x60] sm:$0xff]
    %v859 = vld [vmem:[%s845 + $0x68] sm:$0xff]
    %v860 = vld [vmem:[%s845 + $0x70] sm:$0xff]
    %v861 = vld [vmem:[%s845 + $0x78] sm:$0xff]
    %v862 = vlaneseq
    %v863 = vshrl.u32 %v862, 7
    %v864 = vsub.s32 0, %v863
    %v865 = vrot.slane %v842, %v864
    %866 = vmatprep.subr.mxu0 0.0
    %867 = vmatpush1.msra.mxu0 %v846
    %868 = vmatprep.subr.mxu0 0.0
    %869 = vmatpush1.msra.mxu0 %v847
    %870 = vmatprep.subr.mxu0 0.0
    %871 = vmatpush1.msra.mxu0 %v848
    %872 = vmatprep.subr.mxu0 0.0
    %873 = vmatpush1.msra.mxu0 %v849
    %874 = vmatprep.subr.mxu0 0.0
    %875 = vmatpush1.msra.mxu0 %v850
    %876 = vmatprep.subr.mxu0 0.0
    %877 = vmatpush1.msra.mxu0 %v851
    %878 = vmatprep.subr.mxu0 0.0
    %879 = vmatpush1.msra.mxu0 %v852
    %880 = vmatprep.subr.mxu0 0.0
    %881 = vmatpush1.msra.mxu0 %v853
    %882 = vmatprep.subr.mxu0 0.0
    %883 = vmatpush1.msra.mxu0 %v854
    %884 = vmatprep.subr.mxu0 0.0
    %885 = vmatpush1.msra.mxu0 %v855
    %886 = vmatprep.subr.mxu0 0.0
    %887 = vmatpush1.msra.mxu0 %v856
    %888 = vmatprep.subr.mxu0 0.0
    %889 = vmatpush1.msra.mxu0 %v857
    %890 = vmatprep.subr.mxu0 0.0
    %891 = vmatpush1.msra.mxu0 %v858
    %892 = vmatprep.subr.mxu0 0.0
    %893 = vmatpush1.msra.mxu0 %v859
    %894 = vmatprep.subr.mxu0 0.0
    %895 = vmatpush1.msra.mxu0 %v860
    %896 = vmatprep.subr.mxu0 0.0
    %897 = vmatpush1.msra.mxu0 %v861
    %898 = vmatprep.subr.mxu0 0.0
    %899 = vmatpush1.msra.mxu0 0.0
    %900 = vmatprep.subr.mxu0 0.0
    %901 = vmatpush1.msra.mxu0 0.0
    %902 = vmatprep.subr.mxu0 0.0
    %903 = vmatpush1.msra.mxu0 0.0
    %904 = vmatprep.subr.mxu0 0.0
    %905 = vmatpush1.msra.mxu0 0.0
    %906 = vmatprep.subr.mxu0 0.0
    %907 = vmatpush1.msra.mxu0 0.0
    %908 = vmatprep.subr.mxu0 0.0
    %909 = vmatpush1.msra.mxu0 0.0
    %910 = vmatprep.subr.mxu0 0.0
    %911 = vmatpush1.msra.mxu0 0.0
    %912 = vmatprep.subr.mxu0 0.0
    %913 = vmatpush1.msra.mxu0 0.0
    %914 = vmatprep.subr.mxu0 0.0
    %915 = vmatpush1.msra.mxu0 0.0
    %916 = vmatprep.subr.mxu0 0.0
    %917 = vmatpush1.msra.mxu0 0.0
    %918 = vmatprep.subr.mxu0 0.0
    %919 = vmatpush1.msra.mxu0 0.0
    %920 = vmatprep.subr.mxu0 0.0
    %921 = vmatpush1.msra.mxu0 0.0
    %922 = vmatprep.subr.mxu0 0.0
    %923 = vmatpush1.msra.mxu0 0.0
    %924 = vmatprep.subr.mxu0 0.0
    %925 = vmatpush1.msra.mxu0 0.0
    %926 = vmatprep.subr.mxu0 0.0
    %927 = vmatpush1.msra.mxu0 0.0
    %928 = vmatprep.subr.mxu0 0.0
    %929 = vmatpush1.msra.mxu0 0.0
    %930 = vmatprep.mubr.f32.mxu0 0.0
    %931 = vmatmul.mubr.f32.gmra.mrb[0].mxu0 %v840
    %v932 = vpop.f32.mrb[0].mxu0
    %v933 = vadd.f32 %v865, %v932
    %v934 = vpop.f32.mrb[0].mxu0
    %935 = vmatprep.mubr.f32.mxu0 0.0
    %936 = vmatmul.mubr.f32.gmra.mrb[0].mxu0 %v841
    %v937 = vpop.f32.mrb[0].mxu0
    %v938 = vadd.f32 %v865, %v937
    %v939 = vpop.f32.mrb[0].mxu0
    %940 = vdwg.mxu0
    %v941 = vmax.f32 %v933, 0.0
    %v942 = vmax.f32 %v938, 0.0
    %v943 = vadd.f32 %v941, %v942
    %v944 = vrot.slane %v943, 4
    %v945 = vadd.f32 %v943, %v944
    %v946 = vrot.slane %v945, 2
    %v947 = vadd.f32 %v945, %v946
    %v948 = vrot.slane %v947, 1
    %v949 = vadd.f32 %v947, %v948
    %v950 = vmul.f32 %v949, %v137
    %v951 = vsub.f32 %v941, %v950
    %v952 = vsub.f32 %v942, %v950
    %v953 = vmul.f32 %v951, %v951
    %v954 = vmul.f32 %v952, %v952
    %v955 = vadd.f32 %v953, %v954
    %v956 = vrot.slane %v955, 4
    %v957 = vadd.f32 %v955, %v956
    %v958 = vrot.slane %v957, 2
    %v959 = vadd.f32 %v957, %v958
    %v960 = vrot.slane %v959, 1
    %v961 = vadd.f32 %v959, %v960
    %v962 = vmul.f32 %v961, %v137
    %v963 = vadd.f32 %v962, 1e-05
    %v964 = vrsqrt.pop %v963
    %v965 = vmul.f32 %v964, %v843
    %v966 = vlaneseq
    %v967 = vshrl.u32 %v966, 7
    %v968 = vsub.s32 0, %v967
    %v969 = vrot.slane %v965, %v968
    %v970 = vmul.f32 %v951, %v969
    %v971 = vmul.f32 %v952, %v969
    %v972 = vlaneseq
    %v973 = vshrl.u32 %v972, 7
    %v974 = vsub.s32 0, %v973
    %v975 = vrot.slane %v844, %v974
    %v976 = vadd.f32 %v970, %v975
    %v977 = vadd.f32 %v971, %v975
    %v978 = vld [vmem:[%s2 + $0x1c] sm:$0x1]
    %v979 = vld [vmem:[%s2 + $0x1d] sm:$0x1]
    %v980 = vld [vmem:[%s2 + $0x1e] sm:$0x1]
    %s981 = scalar_lea.vmem [#allocation2], 896
    %v982 = vld [vmem:[%s981] sm:$0xff]
    %v983 = vld [vmem:[%s981 + $0x8] sm:$0xff]
    %v984 = vld [vmem:[%s981 + $0x10] sm:$0xff]
    %v985 = vld [vmem:[%s981 + $0x18] sm:$0xff]
    %v986 = vld [vmem:[%s981 + $0x20] sm:$0xff]
    %v987 = vld [vmem:[%s981 + $0x28] sm:$0xff]
    %v988 = vld [vmem:[%s981 + $0x30] sm:$0xff]
    %v989 = vld [vmem:[%s981 + $0x38] sm:$0xff]
    %v990 = vld [vmem:[%s981 + $0x40] sm:$0xff]
    %v991 = vld [vmem:[%s981 + $0x48] sm:$0xff]
    %v992 = vld [vmem:[%s981 + $0x50] sm:$0xff]
    %v993 = vld [vmem:[%s981 + $0x58] sm:$0xff]
    %v994 = vld [vmem:[%s981 + $0x60] sm:$0xff]
    %v995 = vld [vmem:[%s981 + $0x68] sm:$0xff]
    %v996 = vld [vmem:[%s981 + $0x70] sm:$0xff]
    %v997 = vld [vmem:[%s981 + $0x78] sm:$0xff]
    %v998 = vlaneseq
    %v999 = vshrl.u32 %v998, 7
    %v1000 = vsub.s32 0, %v999
    %v1001 = vrot.slane %v978, %v1000
    %1002 = vmatprep.subr.mxu0 0.0
    %1003 = vmatpush1.msra.mxu0 %v982
    %1004 = vmatprep.subr.mxu0 0.0
    %1005 = vmatpush1.msra.mxu0 %v983
    %1006 = vmatprep.subr.mxu0 0.0
    %1007 = vmatpush1.msra.mxu0 %v984
    %1008 = vmatprep.subr.mxu0 0.0
    %1009 = vmatpush1.msra.mxu0 %v985
    %1010 = vmatprep.subr.mxu0 0.0
    %1011 = vmatpush1.msra.mxu0 %v986
    %1012 = vmatprep.subr.mxu0 0.0
    %1013 = vmatpush1.msra.mxu0 %v987
    %1014 = vmatprep.subr.mxu0 0.0
    %1015 = vmatpush1.msra.mxu0 %v988
    %1016 = vmatprep.subr.mxu0 0.0
    %1017 = vmatpush1.msra.mxu0 %v989
    %1018 = vmatprep.subr.mxu0 0.0
    %1019 = vmatpush1.msra.mxu0 %v990
    %1020 = vmatprep.subr.mxu0 0.0
    %1021 = vmatpush1.msra.mxu0 %v991
    %1022 = vmatprep.subr.mxu0 0.0
    %1023 = vmatpush1.msra.mxu0 %v992
    %1024 = vmatprep.subr.mxu0 0.0
    %1025 = vmatpush1.msra.mxu0 %v993
    %1026 = vmatprep.subr.mxu0 0.0
    %1027 = vmatpush1.msra.mxu0 %v994
    %1028 = vmatprep.subr.mxu0 0.0
    %1029 = vmatpush1.msra.mxu0 %v995
    %1030 = vmatprep.subr.mxu0 0.0
    %1031 = vmatpush1.msra.mxu0 %v996
    %1032 = vmatprep.subr.mxu0 0.0
    %1033 = vmatpush1.msra.mxu0 %v997
    %1034 = vmatprep.subr.mxu0 0.0
    %1035 = vmatpush1.msra.mxu0 0.0
    %1036 = vmatprep.subr.mxu0 0.0
    %1037 = vmatpush1.msra.mxu0 0.0
    %1038 = vmatprep.subr.mxu0 0.0
    %1039 = vmatpush1.msra.mxu0 0.0
    %1040 = vmatprep.subr.mxu0 0.0
    %1041 = vmatpush1.msra.mxu0 0.0
    %1042 = vmatprep.subr.mxu0 0.0
    %1043 = vmatpush1.msra.mxu0 0.0
    %1044 = vmatprep.subr.mxu0 0.0
    %1045 = vmatpush1.msra.mxu0 0.0
    %1046 = vmatprep.subr.mxu0 0.0
    %1047 = vmatpush1.msra.mxu0 0.0
    %1048 = vmatprep.subr.mxu0 0.0
    %1049 = vmatpush1.msra.mxu0 0.0
    %1050 = vmatprep.subr.mxu0 0.0
    %1051 = vmatpush1.msra.mxu0 0.0
    %1052 = vmatprep.subr.mxu0 0.0
    %1053 = vmatpush1.msra.mxu0 0.0
    %1054 = vmatprep.subr.mxu0 0.0
    %1055 = vmatpush1.msra.mxu0 0.0
    %1056 = vmatprep.subr.mxu0 0.0
    %1057 = vmatpush1.msra.mxu0 0.0
    %1058 = vmatprep.subr.mxu0 0.0
    %1059 = vmatpush1.msra.mxu0 0.0
    %1060 = vmatprep.subr.mxu0 0.0
    %1061 = vmatpush1.msra.mxu0 0.0
    %1062 = vmatprep.subr.mxu0 0.0
    %1063 = vmatpush1.msra.mxu0 0.0
    %1064 = vmatprep.subr.mxu0 0.0
    %1065 = vmatpush1.msra.mxu0 0.0
    %1066 = vmatprep.mubr.f32.mxu0 0.0
    %1067 = vmatmul.mubr.f32.gmra.mrb[0].mxu0 %v976
    %v1068 = vpop.f32.mrb[0].mxu0
    %v1069 = vadd.f32 %v1001, %v1068
    %v1070 = vpop.f32.mrb[0].mxu0
    %1071 = vmatprep.mubr.f32.mxu0 0.0
    %1072 = vmatmul.mubr.f32.gmra.mrb[0].mxu0 %v977
    %v1073 = vpop.f32.mrb[0].mxu0
    %v1074 = vadd.f32 %v1001, %v1073
    %v1075 = vpop.f32.mrb[0].mxu0
    %1076 = vdwg.mxu0
    %v1077 = vmax.f32 %v1069, 0.0
    %v1078 = vmax.f32 %v1074, 0.0
    %v1079 = vadd.f32 %v1077, %v1078
    %v1080 = vrot.slane %v1079, 4
    %v1081 = vadd.f32 %v1079, %v1080
    %v1082 = vrot.slane %v1081, 2
    %v1083 = vadd.f32 %v1081, %v1082
    %v1084 = vrot.slane %v1083, 1
    %v1085 = vadd.f32 %v1083, %v1084
    %v1086 = vmul.f32 %v1085, %v137
    %v1087 = vsub.f32 %v1077, %v1086
    %v1088 = vsub.f32 %v1078, %v1086
    %v1089 = vmul.f32 %v1087, %v1087
    %v1090 = vmul.f32 %v1088, %v1088
    %v1091 = vadd.f32 %v1089, %v1090
    %v1092 = vrot.slane %v1091, 4
    %v1093 = vadd.f32 %v1091, %v1092
    %v1094 = vrot.slane %v1093, 2
    %v1095 = vadd.f32 %v1093, %v1094
    %v1096 = vrot.slane %v1095, 1
    %v1097 = vadd.f32 %v1095, %v1096
    %v1098 = vmul.f32 %v1097, %v137
    %v1099 = vadd.f32 %v1098, 1e-05
    %v1100 = vrsqrt.pop %v1099
    %v1101 = vmul.f32 %v1100, %v979
    %v1102 = vlaneseq
    %v1103 = vshrl.u32 %v1102, 7
    %v1104 = vsub.s32 0, %v1103
    %v1105 = vrot.slane %v1101, %v1104
    %v1106 = vmul.f32 %v1087, %v1105
    %v1107 = vmul.f32 %v1088, %v1105
    %v1108 = vlaneseq
    %v1109 = vshrl.u32 %v1108, 7
    %v1110 = vsub.s32 0, %v1109
    %v1111 = vrot.slane %v980, %v1110
    %v1112 = vadd.f32 %v1106, %v1111
    %v1113 = vadd.f32 %v1107, %v1111
    %v1114 = vld [vmem:[%s2 + $0x1f] sm:$0x1]
    %v1115 = vld [vmem:[%s2 + $0x20] sm:$0x1]
    %v1116 = vld [vmem:[%s2 + $0x21] sm:$0x1]
    %s1117 = scalar_lea.vmem [#allocation2], 1024
    %v1118 = vld [vmem:[%s1117] sm:$0xff]
    %v1119 = vld [vmem:[%s1117 + $0x8] sm:$0xff]
    %v1120 = vld [vmem:[%s1117 + $0x10] sm:$0xff]
    %v1121 = vld [vmem:[%s1117 + $0x18] sm:$0xff]
    %v1122 = vld [vmem:[%s1117 + $0x20] sm:$0xff]
    %v1123 = vld [vmem:[%s1117 + $0x28] sm:$0xff]
    %v1124 = vld [vmem:[%s1117 + $0x30] sm:$0xff]
    %v1125 = vld [vmem:[%s1117 + $0x38] sm:$0xff]
    %v1126 = vld [vmem:[%s1117 + $0x40] sm:$0xff]
    %v1127 = vld [vmem:[%s1117 + $0x48] sm:$0xff]
    %v1128 = vld [vmem:[%s1117 + $0x50] sm:$0xff]
    %v1129 = vld [vmem:[%s1117 + $0x58] sm:$0xff]
    %v1130 = vld [vmem:[%s1117 + $0x60] sm:$0xff]
    %v1131 = vld [vmem:[%s1117 + $0x68] sm:$0xff]
    %v1132 = vld [vmem:[%s1117 + $0x70] sm:$0xff]
    %v1133 = vld [vmem:[%s1117 + $0x78] sm:$0xff]
    %v1134 = vlaneseq
    %v1135 = vshrl.u32 %v1134, 7
    %v1136 = vsub.s32 0, %v1135
    %v1137 = vrot.slane %v1114, %v1136
    %1138 = vmatprep.subr.mxu0 0.0
    %1139 = vmatpush1.msra.mxu0 %v1118
    %1140 = vmatprep.subr.mxu0 0.0
    %1141 = vmatpush1.msra.mxu0 %v1119
    %1142 = vmatprep.subr.mxu0 0.0
    %1143 = vmatpush1.msra.mxu0 %v1120
    %1144 = vmatprep.subr.mxu0 0.0
    %1145 = vmatpush1.msra.mxu0 %v1121
    %1146 = vmatprep.subr.mxu0 0.0
    %1147 = vmatpush1.msra.mxu0 %v1122
    %1148 = vmatprep.subr.mxu0 0.0
    %1149 = vmatpush1.msra.mxu0 %v1123
    %1150 = vmatprep.subr.mxu0 0.0
    %1151 = vmatpush1.msra.mxu0 %v1124
    %1152 = vmatprep.subr.mxu0 0.0
    %1153 = vmatpush1.msra.mxu0 %v1125
    %1154 = vmatprep.subr.mxu0 0.0
    %1155 = vmatpush1.msra.mxu0 %v1126
    %1156 = vmatprep.subr.mxu0 0.0
    %1157 = vmatpush1.msra.mxu0 %v1127
    %1158 = vmatprep.subr.mxu0 0.0
    %1159 = vmatpush1.msra.mxu0 %v1128
    %1160 = vmatprep.subr.mxu0 0.0
    %1161 = vmatpush1.msra.mxu0 %v1129
    %1162 = vmatprep.subr.mxu0 0.0
    %1163 = vmatpush1.msra.mxu0 %v1130
    %1164 = vmatprep.subr.mxu0 0.0
    %1165 = vmatpush1.msra.mxu0 %v1131
    %1166 = vmatprep.subr.mxu0 0.0
    %1167 = vmatpush1.msra.mxu0 %v1132
    %1168 = vmatprep.subr.mxu0 0.0
    %1169 = vmatpush1.msra.mxu0 %v1133
    %1170 = vmatprep.subr.mxu0 0.0
    %1171 = vmatpush1.msra.mxu0 0.0
    %1172 = vmatprep.subr.mxu0 0.0
    %1173 = vmatpush1.msra.mxu0 0.0
    %1174 = vmatprep.subr.mxu0 0.0
    %1175 = vmatpush1.msra.mxu0 0.0
    %1176 = vmatprep.subr.mxu0 0.0
    %1177 = vmatpush1.msra.mxu0 0.0
    %1178 = vmatprep.subr.mxu0 0.0
    %1179 = vmatpush1.msra.mxu0 0.0
    %1180 = vmatprep.subr.mxu0 0.0
    %1181 = vmatpush1.msra.mxu0 0.0
    %1182 = vmatprep.subr.mxu0 0.0
    %1183 = vmatpush1.msra.mxu0 0.0
    %1184 = vmatprep.subr.mxu0 0.0
    %1185 = vmatpush1.msra.mxu0 0.0
    %1186 = vmatprep.subr.mxu0 0.0
    %1187 = vmatpush1.msra.mxu0 0.0
    %1188 = vmatprep.subr.mxu0 0.0
    %1189 = vmatpush1.msra.mxu0 0.0
    %1190 = vmatprep.subr.mxu0 0.0
    %1191 = vmatpush1.msra.mxu0 0.0
    %1192 = vmatprep.subr.mxu0 0.0
    %1193 = vmatpush1.msra.mxu0 0.0
    %1194 = vmatprep.subr.mxu0 0.0
    %1195 = vmatpush1.msra.mxu0 0.0
    %1196 = vmatprep.subr.mxu0 0.0
    %1197 = vmatpush1.msra.mxu0 0.0
    %1198 = vmatprep.subr.mxu0 0.0
    %1199 = vmatpush1.msra.mxu0 0.0
    %1200 = vmatprep.subr.mxu0 0.0
    %1201 = vmatpush1.msra.mxu0 0.0
    %1202 = vmatprep.mubr.f32.mxu0 0.0
    %1203 = vmatmul.mubr.f32.gmra.mrb[0].mxu0 %v1112
    %v1204 = vpop.f32.mrb[0].mxu0
    %v1205 = vadd.f32 %v1137, %v1204
    %v1206 = vpop.f32.mrb[0].mxu0
    %1207 = vmatprep.mubr.f32.mxu0 0.0
    %1208 = vmatmul.mubr.f32.gmra.mrb[0].mxu0 %v1113
    %v1209 = vpop.f32.mrb[0].mxu0
    %v1210 = vadd.f32 %v1137, %v1209
    %v1211 = vpop.f32.mrb[0].mxu0
    %1212 = vdwg.mxu0
    %v1213 = vmax.f32 %v1205, 0.0
    %v1214 = vmax.f32 %v1210, 0.0
    %v1215 = vadd.f32 %v1213, %v1214
    %v1216 = vrot.slane %v1215, 4
    %v1217 = vadd.f32 %v1215, %v1216
    %v1218 = vrot.slane %v1217, 2
    %v1219 = vadd.f32 %v1217, %v1218
    %v1220 = vrot.slane %v1219, 1
    %v1221 = vadd.f32 %v1219, %v1220
    %v1222 = vmul.f32 %v1221, %v137
    %v1223 = vsub.f32 %v1213, %v1222
    %v1224 = vsub.f32 %v1214, %v1222
    %v1225 = vmul.f32 %v1223, %v1223
    %v1226 = vmul.f32 %v1224, %v1224
    %v1227 = vadd.f32 %v1225, %v1226
    %v1228 = vrot.slane %v1227, 4
    %v1229 = vadd.f32 %v1227, %v1228
    %v1230 = vrot.slane %v1229, 2
    %v1231 = vadd.f32 %v1229, %v1230
    %v1232 = vrot.slane %v1231, 1
    %v1233 = vadd.f32 %v1231, %v1232
    %v1234 = vmul.f32 %v1233, %v137
    %v1235 = vadd.f32 %v1234, 1e-05
    %v1236 = vrsqrt.pop %v1235
    %v1237 = vmul.f32 %v1236, %v1115
    %v1238 = vlaneseq
    %v1239 = vshrl.u32 %v1238, 7
    %v1240 = vsub.s32 0, %v1239
    %v1241 = vrot.slane %v1237, %v1240
    %v1242 = vmul.f32 %v1223, %v1241
    %v1243 = vmul.f32 %v1224, %v1241
    %v1244 = vlaneseq
    %v1245 = vshrl.u32 %v1244, 7
    %v1246 = vsub.s32 0, %v1245
    %v1247 = vrot.slane %v1116, %v1246
    %v1248 = vadd.f32 %v1242, %v1247
    %v1249 = vadd.f32 %v1243, %v1247
    %s1250 = scalar_lea.vmem [#allocation2], 1152
    %v1251 = vld [vmem:[%s1250] sm:$0xff]
    %v1252 = vld [vmem:[%s1250 + $0x8] sm:$0xff]
    %v1253 = vld [vmem:[%s1250 + $0x10] sm:$0xff]
    %v1254 = vld [vmem:[%s1250 + $0x18] sm:$0xff]
    %v1255 = vld [vmem:[%s1250 + $0x20] sm:$0xff]
    %v1256 = vld [vmem:[%s1250 + $0x28] sm:$0xff]
    %v1257 = vld [vmem:[%s1250 + $0x30] sm:$0xff]
    %v1258 = vld [vmem:[%s1250 + $0x38] sm:$0xff]
    %v1259 = vld [vmem:[%s1250 + $0x40] sm:$0xff]
    %v1260 = vld [vmem:[%s1250 + $0x48] sm:$0xff]
    %v1261 = vld [vmem:[%s1250 + $0x50] sm:$0xff]
    %v1262 = vld [vmem:[%s1250 + $0x58] sm:$0xff]
    %v1263 = vld [vmem:[%s1250 + $0x60] sm:$0xff]
    %v1264 = vld [vmem:[%s1250 + $0x68] sm:$0xff]
    %v1265 = vld [vmem:[%s1250 + $0x70] sm:$0xff]
    %v1266 = vld [vmem:[%s1250 + $0x78] sm:$0xff]
    %v1267 = vld [vmem:[%s2 + $0x22] sm:$0x1]
    %v1268 = vlaneseq
    %v1269 = vshrl.u32 %v1268, 7
    %v1270 = vsub.s32 0, %v1269
    %v1271 = vrot.slane %v1267, %v1270
    %1272 = vmatprep.subr.mxu0 0.0
    %1273 = vmatpush1.msra.mxu0 %v1251
    %1274 = vmatprep.subr.mxu0 0.0
    %1275 = vmatpush1.msra.mxu0 %v1252
    %1276 = vmatprep.subr.mxu0 0.0
    %1277 = vmatpush1.msra.mxu0 %v1253
    %1278 = vmatprep.subr.mxu0 0.0
    %1279 = vmatpush1.msra.mxu0 %v1254
    %1280 = vmatprep.subr.mxu0 0.0
    %1281 = vmatpush1.msra.mxu0 %v1255
    %1282 = vmatprep.subr.mxu0 0.0
    %1283 = vmatpush1.msra.mxu0 %v1256
    %1284 = vmatprep.subr.mxu0 0.0
    %1285 = vmatpush1.msra.mxu0 %v1257
    %1286 = vmatprep.subr.mxu0 0.0
    %1287 = vmatpush1.msra.mxu0 %v1258
    %1288 = vmatprep.subr.mxu0 0.0
    %1289 = vmatpush1.msra.mxu0 %v1259
    %1290 = vmatprep.subr.mxu0 0.0
    %1291 = vmatpush1.msra.mxu0 %v1260
    %1292 = vmatprep.subr.mxu0 0.0
    %1293 = vmatpush1.msra.mxu0 %v1261
    %1294 = vmatprep.subr.mxu0 0.0
    %1295 = vmatpush1.msra.mxu0 %v1262
    %1296 = vmatprep.subr.mxu0 0.0
    %1297 = vmatpush1.msra.mxu0 %v1263
    %1298 = vmatprep.subr.mxu0 0.0
    %1299 = vmatpush1.msra.mxu0 %v1264
    %1300 = vmatprep.subr.mxu0 0.0
    %1301 = vmatpush1.msra.mxu0 %v1265
    %1302 = vmatprep.subr.mxu0 0.0
    %1303 = vmatpush1.msra.mxu0 %v1266
    %1304 = vmatprep.subr.mxu0 0.0
    %1305 = vmatpush1.msra.mxu0 0.0
    %1306 = vmatprep.subr.mxu0 0.0
    %1307 = vmatpush1.msra.mxu0 0.0
    %1308 = vmatprep.subr.mxu0 0.0
    %1309 = vmatpush1.msra.mxu0 0.0
    %1310 = vmatprep.subr.mxu0 0.0
    %1311 = vmatpush1.msra.mxu0 0.0
    %1312 = vmatprep.subr.mxu0 0.0
    %1313 = vmatpush1.msra.mxu0 0.0
    %1314 = vmatprep.subr.mxu0 0.0
    %1315 = vmatpush1.msra.mxu0 0.0
    %1316 = vmatprep.subr.mxu0 0.0
    %1317 = vmatpush1.msra.mxu0 0.0
    %1318 = vmatprep.subr.mxu0 0.0
    %1319 = vmatpush1.msra.mxu0 0.0
    %1320 = vmatprep.subr.mxu0 0.0
    %1321 = vmatpush1.msra.mxu0 0.0
    %1322 = vmatprep.subr.mxu0 0.0
    %1323 = vmatpush1.msra.mxu0 0.0
    %1324 = vmatprep.subr.mxu0 0.0
    %1325 = vmatpush1.msra.mxu0 0.0
    %1326 = vmatprep.subr.mxu0 0.0
    %1327 = vmatpush1.msra.mxu0 0.0
    %1328 = vmatprep.subr.mxu0 0.0
    %1329 = vmatpush1.msra.mxu0 0.0
    %1330 = vmatprep.subr.mxu0 0.0
    %1331 = vmatpush1.msra.mxu0 0.0
    %1332 = vmatprep.subr.mxu0 0.0
    %1333 = vmatpush1.msra.mxu0 0.0
    %1334 = vmatprep.subr.mxu0 0.0
    %1335 = vmatpush1.msra.mxu0 0.0
    %1336 = vmatprep.mubr.f32.mxu0 0.0
    %1337 = vmatmul.mubr.f32.gmra.mrb[0].mxu0 %v1248
    %v1338 = vpop.f32.mrb[0].mxu0
    %v1339 = vadd.f32 %v1271, %v1338
    %v1340 = vpop.f32.mrb[0].mxu0
    %1341 = vmatprep.mubr.f32.mxu0 0.0
    %1342 = vmatmul.mubr.f32.gmra.mrb[0].mxu0 %v1249
    %v1343 = vpop.f32.mrb[0].mxu0
    %v1344 = vadd.f32 %v1271, %v1343
    %v1345 = vpop.f32.mrb[0].mxu0
    %1346 = vdwg.mxu0
    %1347 = vst [vmem:[%s3] sm:$0xff] %v1339
    %1348 = vst [vmem:[%s3 + $0x8] sm:$0xff] %v1344
    // Predicated region
    $region18: #{forward_model.1} parent=1 // pred_check
      _
    $region19: #{forward_model.1} parent=1 // pred_check_branch
      %1350 = sbr.rel (0) target = $region21
    $region20: #{forward_model.1} parent=1 // pred_region
      _
    $region21: #{forward_model.1} parent=1 // pred_fallthru
      _
    // Predicated region
    $region22: #{forward_model.1} parent=1 // pred_check
      _
    $region23: #{forward_model.1} parent=1 // pred_check_branch
      %1352 = sbr.rel (0) target = $region25
    $region24: #{forward_model.1} parent=1 // pred_region
      _
    $region25: #{forward_model.1} parent=1 // pred_fallthru
      _
    %1353 = vsyncpa [#allocation3], 1

</llo_original>
